<compile_context>
chip_gen: v7x
topology: tpu7x:2x2x1
jax: 0.10.0
libtpu: 0.0.40
codegen_flags: <defaults>
</compile_context>

<pallas_src>
import numpy as np
import jax
import jax.numpy as jnp
from jax.experimental import pallas as pl
from jax.experimental.pallas import tpu as pltpu


def _round_up(v, m):
    return (v + m - 1) // m * m


# ----------------------------- fused Pallas kernel ---------------------------

def _make_conv_block_kernel(Wp, L1, L2, Cin, Cout):
    """conv1+BN+ReLU -> conv2+BN+ReLU -> 2x2 avg-pool, whole batch, one step."""
    offs = [dy * Wp + dx for dy in range(3) for dx in range(3)]

    def kernel(x_ref, w1_ref, w2_ref, s1_ref, s2_ref, m_ref, p_ref, o_ref,
               rhs1_ref, rhs2_ref):
        # x_ref  : (Cin, Lx)        bf16  flattened padded canvas (lanes = flat pos)
        # w1_ref : (Cout, 9*Cin)    bf16  conv1 taps stacked on K, BN1 scale folded
        # w2_ref : (Cout, 9*Cout)   bf16  conv2 taps stacked on K, BN2 scale folded
        # s1/s2  : (Cout, 1)        f32   BN shifts
        # m_ref  : (1, L1)          f32   0/1 mask of valid core pixels
        # p_ref  : (L2, N*Ho*Wo)    bf16  constant 2x2 avg-pool selection matrix
        # o_ref  : (Cout, N*Ho*Wo)  f32   lane-dense output (last dim = 128 here)
        # rhs1_ref: (9*Cin, L1) bf16 scratch ; rhs2_ref: (9*Cout, L2) bf16 scratch

        # ---- stage the 9 shifted taps into ONE stacked im2col RHS (conv1) ----
        for t, off in enumerate(offs):
            rhs1_ref[pl.ds(t * Cin, Cin), :] = x_ref[:, pl.ds(off, L1)]

        # ---- conv1 (+folded BN scale) as a single K=9*Cin matmul ----
        acc1 = jnp.dot(w1_ref[...], rhs1_ref[...],
                       preferred_element_type=jnp.float32)          # (Cout, L1) f32

        # BN shift + ReLU, re-zero padding rings / image seams, single bf16 cast.
        z = (jnp.maximum(acc1 + s1_ref[...], 0.0) * m_ref[...]).astype(jnp.bfloat16)

        # ---- stage conv2 taps and run one K=9*Cout matmul ----
        for t, off in enumerate(offs):
            rhs2_ref[pl.ds(t * Cout, Cout), :] = z[:, off:off + L2]
        acc2 = jnp.dot(w2_ref[...], rhs2_ref[...],
                       preferred_element_type=jnp.float32)          # (Cout, L2) f32
        y2 = jnp.maximum(acc2 + s2_ref[...], 0.0)

        # ---- fused 2x2 avg-pool: one matmul against a constant 0/0.25 matrix ----
        pooled = jnp.dot(y2.astype(jnp.bfloat16), p_ref[...],
                         preferred_element_type=jnp.float32)        # (Cout, N*Ho*Wo)
        o_ref[...] = pooled

    return kernel


# ------------------------------- host wrapper --------------------------------

def conv_block_forward(x_nchw, params, pool_type="avg"):
    """Pallas implementation of ConvBlock.forward(x, pool_size=(2,2), pool_type='avg')."""
    if pool_type != "avg":
        raise Exception("Incorrect argument!")

    N, Cin, H, W = x_nchw.shape
    Cout = params["w1"].shape[0]
    Hp, Wp = H + 2, W + 2
    Ho, Wo = H // 2, W // 2
    maxoff = 2 * Wp + 2                              # largest tap offset (dy=dx=2)
    Pc = N * Hp * Wp                                 # stacked padded canvas length
    pc_core_max = ((N - 1) * Hp + H) * Wp + W        # last core position of last image
    L2 = _round_up(pc_core_max + 1, 8)               # conv2-output / pool working length
    L1 = _round_up(L2 + maxoff, 8)                   # conv1-output / conv2-input length
    Lx = L1 + maxoff                                 # flattened padded-input length

    # ---- host-side layout glue only (no compute, no 9x im2col in HBM) ----
    # Stack the N zero-padded images vertically; each keeps its own zero ring.
    x_pad = jnp.pad(x_nchw, ((0, 0), (0, 0), (1, 1), (1, 1)))       # (N,Cin,Hp,Wp)
    canvas = jnp.transpose(x_pad, (1, 0, 2, 3)).reshape(Cin, Pc)
    x_lin = jnp.pad(canvas, ((0, 0), (maxoff, Lx - maxoff - Pc))).astype(jnp.bfloat16)

    def prep_w(w, scale):
        # (Cout, Cin, 3, 3) -> (Cout, 9*Cin) with column index t*Cin + c, t = dy*3+dx,
        # BN scale folded along Cout.
        co, ci = w.shape[0], w.shape[1]
        wk = jnp.transpose(w, (0, 2, 3, 1)).reshape(co, 9 * ci)
        return (wk * scale[:, None]).astype(jnp.bfloat16)

    w1s = prep_w(params["w1"], params["bn1_scale"])
    w2s = prep_w(params["w2"], params["bn2_scale"])
    s1 = params["bn1_shift"].reshape(Cout, 1).astype(jnp.float32)
    s2 = params["bn2_shift"].reshape(Cout, 1).astype(jnp.float32)

    # 0/1 mask of valid core pixels: conv1 output for canvas position q sits at
    # lane j = q + Wp + 1 of the conv1 output slab.
    mask_np = np.zeros((1, L1), np.float32)
    for n in range(N):
        for y in range(H):
            for xc in range(W):
                q = (n * Hp + 1 + y) * Wp + (1 + xc)
                mask_np[0, q + Wp + 1] = 1.0
    mask = jnp.asarray(mask_np)

    # Constant 2x2 avg-pool selection matrix (row index = canvas flat position,
    # column index = n*Ho*Wo + qr*Wo + rc).  Output is lane-dense: N*Ho*Wo lanes.
    pool_np = np.zeros((L2, N * Ho * Wo), np.float32)
    for n in range(N):
        for qr in range(Ho):
            for rc in range(Wo):
                col = n * Ho * Wo + qr * Wo + rc
                for a in range(2):
                    for b in range(2):
                        k = (n * Hp + 2 * qr + a + 1) * Wp + (2 * rc + b + 1)
                        pool_np[k, col] = 0.25
    pool_mat = jnp.asarray(pool_np, jnp.bfloat16)

    kernel = _make_conv_block_kernel(Wp, L1, L2, Cin, Cout)
    out = pl.pallas_call(
        kernel,
        out_shape=jax.ShapeDtypeStruct((Cout, N * Ho * Wo), jnp.float32),
        grid_spec=pltpu.PrefetchScalarGridSpec(
            num_scalar_prefetch=0,
            grid=(1,),
            in_specs=[
                pl.BlockSpec((Cin, Lx), lambda i: (0, 0)),
                pl.BlockSpec((Cout, 9 * Cin), lambda i: (0, 0)),
                pl.BlockSpec((Cout, 9 * Cout), lambda i: (0, 0)),
                pl.BlockSpec((Cout, 1), lambda i: (0, 0)),
                pl.BlockSpec((Cout, 1), lambda i: (0, 0)),
                pl.BlockSpec((1, L1), lambda i: (0, 0)),
                pl.BlockSpec((L2, N * Ho * Wo), lambda i: (0, 0)),
            ],
            out_specs=pl.BlockSpec((Cout, N * Ho * Wo), lambda i: (0, 0)),
            scratch_shapes=[
                pltpu.VMEM((9 * Cin, L1), jnp.bfloat16),    # stacked im2col RHS, conv1
                pltpu.VMEM((9 * Cout, L2), jnp.bfloat16),   # stacked im2col RHS, conv2
            ],
        ),
        compiler_params=pltpu.CompilerParams(
            dimension_semantics=("arbitrary",),
        ),
    )(x_lin, w1s, w2s, s1, s2, mask, pool_mat)

    # (Cout, N*Ho*Wo) -> (N, Cout, Ho, Wo)
    return out.reshape(Cout, N, Ho, Wo).transpose(1, 0, 2, 3)


# ------------------------------- pure-JAX ref ---------------------------------

def ref_forward(x_nchw, params):
    def conv(x, w):
        return jax.lax.conv_general_dilated(
            x, w, window_strides=(1, 1), padding=((1, 1), (1, 1)),
            dimension_numbers=("NCHW", "OIHW", "NCHW"))

    def bn_relu(y, scale, shift):
        return jnp.maximum(y * scale[None, :, None, None] + shift[None, :, None, None], 0.0)

    y = bn_relu(conv(x_nchw, params["w1"]), params["bn1_scale"], params["bn1_shift"])
    y = bn_relu(conv(y, params["w2"]), params["bn2_scale"], params["bn2_shift"])
    N, C, H, W = y.shape
    return y.reshape(N, C, H // 2, 2, W // 2, 2).mean(axis=(3, 5))


# ----------------------------------- main -------------------------------------

if __name__ == "__main__":
    N, Cin, Cout, H, W = 2, 4, 8, 16, 16
    eps = 1e-5

    key = jax.random.PRNGKey(0)
    k1, k2, kx = jax.random.split(key, 3)

    def xavier_uniform(k, shape):  # matches nn.init.xavier_uniform_ for conv weights
        fan_in = shape[1] * shape[2] * shape[3]
        fan_out = shape[0] * shape[2] * shape[3]
        bound = (6.0 / (fan_in + fan_out)) ** 0.5
        return jax.random.uniform(k, shape, jnp.float32, -bound, bound)

    # BatchNorm per init_bn: gamma=1, beta=0; running stats mean=0, var=1 (eval mode).
    gamma = jnp.ones((Cout,), jnp.float32)
    beta = jnp.zeros((Cout,), jnp.float32)
    rmean = jnp.zeros((Cout,), jnp.float32)
    rvar = jnp.ones((Cout,), jnp.float32)
    bn_scale = gamma / jnp.sqrt(rvar + eps)
    bn_shift = beta - rmean * bn_scale

    params = {
        "w1": xavier_uniform(k1, (Cout, Cin, 3, 3)),
        "w2": xavier_uniform(k2, (Cout, Cout, 3, 3)),
        "bn1_scale": bn_scale, "bn1_shift": bn_shift,
        "bn2_scale": bn_scale, "bn2_shift": bn_shift,
    }

    x = jax.random.normal(kx, (N, Cin, H, W), jnp.float32)

    out = conv_block_forward(x, params)
    out = jax.block_until_ready(out)

    assert out.shape == (N, Cout, H // 2, W // 2), out.shape
    ref = ref_forward(x, params)
    # bf16 MXU operands with f32 accumulation -> compare with a bf16-level tolerance.
    np.testing.assert_allclose(np.asarray(out), np.asarray(ref), rtol=2e-2, atol=2e-2)

    print("KERNEL_OK")
</pallas_src>

<mosaic_0001>
module attributes {stable_mosaic.version = 11 : i64} {
  func.func @kernel(%arg0: i32, %arg1: memref<4x710xbf16, #tpu.memory_space<vmem>>, %arg2: memref<8x36xbf16, #tpu.memory_space<vmem>>, %arg3: memref<8x72xbf16, #tpu.memory_space<vmem>>, %arg4: memref<8x1xf32, #tpu.memory_space<vmem>>, %arg5: memref<8x1xf32, #tpu.memory_space<vmem>>, %arg6: memref<1x672xf32, #tpu.memory_space<vmem>>, %arg7: memref<632x128xbf16, #tpu.memory_space<vmem>>, %arg8: memref<8x128xf32, #tpu.memory_space<vmem>>, %arg9: memref<36x672xbf16, #tpu.memory_space<vmem>>, %arg10: memref<72x632xbf16, #tpu.memory_space<vmem>>) attributes {dimension_semantics = [#tpu.dimension_semantics<arbitrary>], iteration_bounds = array<i64: 1>, scalar_prefetch = 0 : i64, scratch_operands = 2 : i64, tpu.core_type = #tpu.core_type<tc>, window_params = [{pipeline_mode = #tpu.pipeline_mode<synchronous>, transform_indices = @transform_0, window_bounds = array<i64: 4, 710>}, {pipeline_mode = #tpu.pipeline_mode<synchronous>, transform_indices = @transform_1, window_bounds = array<i64: 8, 36>}, {pipeline_mode = #tpu.pipeline_mode<synchronous>, transform_indices = @transform_2, window_bounds = array<i64: 8, 72>}, {pipeline_mode = #tpu.pipeline_mode<synchronous>, transform_indices = @transform_3, window_bounds = array<i64: 8, 1>}, {pipeline_mode = #tpu.pipeline_mode<synchronous>, transform_indices = @transform_4, window_bounds = array<i64: 8, 1>}, {pipeline_mode = #tpu.pipeline_mode<synchronous>, transform_indices = @transform_5, window_bounds = array<i64: 1, 672>}, {pipeline_mode = #tpu.pipeline_mode<synchronous>, transform_indices = @transform_6, window_bounds = array<i64: 632, 128>}, {pipeline_mode = #tpu.pipeline_mode<synchronous>, transform_indices = @transform_7, window_bounds = array<i64: 8, 128>}]} {
    %c0 = arith.constant 0 : index
    %c0_0 = arith.constant 0 : index
    %0 = vector.load %arg1[%c0, %c0_0] : memref<4x710xbf16, #tpu.memory_space<vmem>>, vector<4x672xbf16>
    %c0_1 = arith.constant 0 : index
    %c0_2 = arith.constant 0 : index
    %1 = vector.load %arg9[%c0_1, %c0_2] : memref<36x672xbf16, #tpu.memory_space<vmem>>, vector<4x672xbf16>
    tpu.vector_store %arg9[%c0_1, %c0_2], %0 {strides = array<i32>} : memref<36x672xbf16, #tpu.memory_space<vmem>>, vector<4x672xbf16>,
    %c0_3 = arith.constant 0 : index
    %c1 = arith.constant 1 : index
    %2 = vector.load %arg1[%c0_3, %c1] : memref<4x710xbf16, #tpu.memory_space<vmem>>, vector<4x672xbf16>
    %c4 = arith.constant 4 : index
    %c0_4 = arith.constant 0 : index
    %3 = vector.load %arg9[%c4, %c0_4] : memref<36x672xbf16, #tpu.memory_space<vmem>>, vector<4x672xbf16>
    tpu.vector_store %arg9[%c4, %c0_4], %2 {strides = array<i32>} : memref<36x672xbf16, #tpu.memory_space<vmem>>, vector<4x672xbf16>,
    %c0_5 = arith.constant 0 : index
    %c2 = arith.constant 2 : index
    %4 = vector.load %arg1[%c0_5, %c2] : memref<4x710xbf16, #tpu.memory_space<vmem>>, vector<4x672xbf16>
    %c8 = arith.constant 8 : index
    %c0_6 = arith.constant 0 : index
    %5 = vector.load %arg9[%c8, %c0_6] : memref<36x672xbf16, #tpu.memory_space<vmem>>, vector<4x672xbf16>
    tpu.vector_store %arg9[%c8, %c0_6], %4 {strides = array<i32>} : memref<36x672xbf16, #tpu.memory_space<vmem>>, vector<4x672xbf16>,
    %c0_7 = arith.constant 0 : index
    %c18 = arith.constant 18 : index
    %6 = vector.load %arg1[%c0_7, %c18] : memref<4x710xbf16, #tpu.memory_space<vmem>>, vector<4x672xbf16>
    %c12 = arith.constant 12 : index
    %c0_8 = arith.constant 0 : index
    %7 = vector.load %arg9[%c12, %c0_8] : memref<36x672xbf16, #tpu.memory_space<vmem>>, vector<4x672xbf16>
    tpu.vector_store %arg9[%c12, %c0_8], %6 {strides = array<i32>} : memref<36x672xbf16, #tpu.memory_space<vmem>>, vector<4x672xbf16>,
    %c0_9 = arith.constant 0 : index
    %c19 = arith.constant 19 : index
    %8 = vector.load %arg1[%c0_9, %c19] : memref<4x710xbf16, #tpu.memory_space<vmem>>, vector<4x672xbf16>
    %c16 = arith.constant 16 : index
    %c0_10 = arith.constant 0 : index
    %9 = vector.load %arg9[%c16, %c0_10] : memref<36x672xbf16, #tpu.memory_space<vmem>>, vector<4x672xbf16>
    tpu.vector_store %arg9[%c16, %c0_10], %8 {strides = array<i32>} : memref<36x672xbf16, #tpu.memory_space<vmem>>, vector<4x672xbf16>,
    %c0_11 = arith.constant 0 : index
    %c20 = arith.constant 20 : index
    %10 = vector.load %arg1[%c0_11, %c20] : memref<4x710xbf16, #tpu.memory_space<vmem>>, vector<4x672xbf16>
    %c20_12 = arith.constant 20 : index
    %c0_13 = arith.constant 0 : index
    %11 = vector.load %arg9[%c20_12, %c0_13] : memref<36x672xbf16, #tpu.memory_space<vmem>>, vector<4x672xbf16>
    tpu.vector_store %arg9[%c20_12, %c0_13], %10 {strides = array<i32>} : memref<36x672xbf16, #tpu.memory_space<vmem>>, vector<4x672xbf16>,
    %c0_14 = arith.constant 0 : index
    %c36 = arith.constant 36 : index
    %12 = vector.load %arg1[%c0_14, %c36] : memref<4x710xbf16, #tpu.memory_space<vmem>>, vector<4x672xbf16>
    %c24 = arith.constant 24 : index
    %c0_15 = arith.constant 0 : index
    %13 = vector.load %arg9[%c24, %c0_15] : memref<36x672xbf16, #tpu.memory_space<vmem>>, vector<4x672xbf16>
    tpu.vector_store %arg9[%c24, %c0_15], %12 {strides = array<i32>} : memref<36x672xbf16, #tpu.memory_space<vmem>>, vector<4x672xbf16>,
    %c0_16 = arith.constant 0 : index
    %c37 = arith.constant 37 : index
    %14 = vector.load %arg1[%c0_16, %c37] : memref<4x710xbf16, #tpu.memory_space<vmem>>, vector<4x672xbf16>
    %c28 = arith.constant 28 : index
    %c0_17 = arith.constant 0 : index
    %15 = vector.load %arg9[%c28, %c0_17] : memref<36x672xbf16, #tpu.memory_space<vmem>>, vector<4x672xbf16>
    tpu.vector_store %arg9[%c28, %c0_17], %14 {strides = array<i32>} : memref<36x672xbf16, #tpu.memory_space<vmem>>, vector<4x672xbf16>,
    %c0_18 = arith.constant 0 : index
    %c38 = arith.constant 38 : index
    %16 = vector.load %arg1[%c0_18, %c38] : memref<4x710xbf16, #tpu.memory_space<vmem>>, vector<4x672xbf16>
    %c32 = arith.constant 32 : index
    %c0_19 = arith.constant 0 : index
    %17 = vector.load %arg9[%c32, %c0_19] : memref<36x672xbf16, #tpu.memory_space<vmem>>, vector<4x672xbf16>
    tpu.vector_store %arg9[%c32, %c0_19], %16 {strides = array<i32>} : memref<36x672xbf16, #tpu.memory_space<vmem>>, vector<4x672xbf16>,
    %c0_20 = arith.constant 0 : index
    %c0_21 = arith.constant 0 : index
    %18 = vector.load %arg2[%c0_20, %c0_21] : memref<8x36xbf16, #tpu.memory_space<vmem>>, vector<8x36xbf16>
    %c0_22 = arith.constant 0 : index
    %c0_23 = arith.constant 0 : index
    %19 = vector.load %arg9[%c0_22, %c0_23] : memref<36x672xbf16, #tpu.memory_space<vmem>>, vector<36x672xbf16>
    %cst = arith.constant dense<0.000000e+00> : vector<8x672xf32>
    %20 = tpu.matmul %18, %19, %cst {dimension_numbers = #tpu.dot_dimension_numbers<[1], [0], [0], [1], [0, 0, 1, 1], [], []>} : vector<8x36xbf16>, vector<36x672xbf16>, vector<8x672xf32> -> vector<8x672xf32>
    %c0_24 = arith.constant 0 : index
    %c0_25 = arith.constant 0 : index
    %21 = vector.load %arg4[%c0_24, %c0_25] : memref<8x1xf32, #tpu.memory_space<vmem>>, vector<8x1xf32>
    %22 = vector.broadcast %21 : vector<8x1xf32> to vector<8x672xf32>
    %23 = arith.addf %20, %22 : vector<8x672xf32>
    %cst_26 = arith.constant 0.000000e+00 : f32
    %24 = vector.broadcast %cst_26 : f32 to vector<8x672xf32>
    %25 = arith.maximumf %23, %24 : vector<8x672xf32>
    %c0_27 = arith.constant 0 : index
    %c0_28 = arith.constant 0 : index
    %26 = vector.load %arg6[%c0_27, %c0_28] : memref<1x672xf32, #tpu.memory_space<vmem>>, vector<1x672xf32>
    %27 = vector.broadcast %26 : vector<1x672xf32> to vector<8x672xf32>
    %28 = arith.mulf %25, %27 : vector<8x672xf32>
    %29 = arith.truncf %28 : vector<8x672xf32> to vector<8x672xbf16>
    %30 = vector.extract_strided_slice %29 {offsets = [0, 0], sizes = [8, 632], strides = [1, 1]} : vector<8x672xbf16> to vector<8x632xbf16>
    %c0_29 = arith.constant 0 : index
    %c0_30 = arith.constant 0 : index
    %31 = vector.load %arg10[%c0_29, %c0_30] : memref<72x632xbf16, #tpu.memory_space<vmem>>, vector<8x632xbf16>
    tpu.vector_store %arg10[%c0_29, %c0_30], %30 {strides = array<i32>} : memref<72x632xbf16, #tpu.memory_space<vmem>>, vector<8x632xbf16>,
    %32 = vector.extract_strided_slice %29 {offsets = [0, 1], sizes = [8, 632], strides = [1, 1]} : vector<8x672xbf16> to vector<8x632xbf16>
    %c8_31 = arith.constant 8 : index
    %c0_32 = arith.constant 0 : index
    %33 = vector.load %arg10[%c8_31, %c0_32] : memref<72x632xbf16, #tpu.memory_space<vmem>>, vector<8x632xbf16>
    tpu.vector_store %arg10[%c8_31, %c0_32], %32 {strides = array<i32>} : memref<72x632xbf16, #tpu.memory_space<vmem>>, vector<8x632xbf16>,
    %34 = vector.extract_strided_slice %29 {offsets = [0, 2], sizes = [8, 632], strides = [1, 1]} : vector<8x672xbf16> to vector<8x632xbf16>
    %c16_33 = arith.constant 16 : index
    %c0_34 = arith.constant 0 : index
    %35 = vector.load %arg10[%c16_33, %c0_34] : memref<72x632xbf16, #tpu.memory_space<vmem>>, vector<8x632xbf16>
    tpu.vector_store %arg10[%c16_33, %c0_34], %34 {strides = array<i32>} : memref<72x632xbf16, #tpu.memory_space<vmem>>, vector<8x632xbf16>,
    %36 = vector.extract_strided_slice %29 {offsets = [0, 18], sizes = [8, 632], strides = [1, 1]} : vector<8x672xbf16> to vector<8x632xbf16>
    %c24_35 = arith.constant 24 : index
    %c0_36 = arith.constant 0 : index
    %37 = vector.load %arg10[%c24_35, %c0_36] : memref<72x632xbf16, #tpu.memory_space<vmem>>, vector<8x632xbf16>
    tpu.vector_store %arg10[%c24_35, %c0_36], %36 {strides = array<i32>} : memref<72x632xbf16, #tpu.memory_space<vmem>>, vector<8x632xbf16>,
    %38 = vector.extract_strided_slice %29 {offsets = [0, 19], sizes = [8, 632], strides = [1, 1]} : vector<8x672xbf16> to vector<8x632xbf16>
    %c32_37 = arith.constant 32 : index
    %c0_38 = arith.constant 0 : index
    %39 = vector.load %arg10[%c32_37, %c0_38] : memref<72x632xbf16, #tpu.memory_space<vmem>>, vector<8x632xbf16>
    tpu.vector_store %arg10[%c32_37, %c0_38], %38 {strides = array<i32>} : memref<72x632xbf16, #tpu.memory_space<vmem>>, vector<8x632xbf16>,
    %40 = vector.extract_strided_slice %29 {offsets = [0, 20], sizes = [8, 632], strides = [1, 1]} : vector<8x672xbf16> to vector<8x632xbf16>
    %c40 = arith.constant 40 : index
    %c0_39 = arith.constant 0 : index
    %41 = vector.load %arg10[%c40, %c0_39] : memref<72x632xbf16, #tpu.memory_space<vmem>>, vector<8x632xbf16>
    tpu.vector_store %arg10[%c40, %c0_39], %40 {strides = array<i32>} : memref<72x632xbf16, #tpu.memory_space<vmem>>, vector<8x632xbf16>,
    %42 = vector.extract_strided_slice %29 {offsets = [0, 36], sizes = [8, 632], strides = [1, 1]} : vector<8x672xbf16> to vector<8x632xbf16>
    %c48 = arith.constant 48 : index
    %c0_40 = arith.constant 0 : index
    %43 = vector.load %arg10[%c48, %c0_40] : memref<72x632xbf16, #tpu.memory_space<vmem>>, vector<8x632xbf16>
    tpu.vector_store %arg10[%c48, %c0_40], %42 {strides = array<i32>} : memref<72x632xbf16, #tpu.memory_space<vmem>>, vector<8x632xbf16>,
    %44 = vector.extract_strided_slice %29 {offsets = [0, 37], sizes = [8, 632], strides = [1, 1]} : vector<8x672xbf16> to vector<8x632xbf16>
    %c56 = arith.constant 56 : index
    %c0_41 = arith.constant 0 : index
    %45 = vector.load %arg10[%c56, %c0_41] : memref<72x632xbf16, #tpu.memory_space<vmem>>, vector<8x632xbf16>
    tpu.vector_store %arg10[%c56, %c0_41], %44 {strides = array<i32>} : memref<72x632xbf16, #tpu.memory_space<vmem>>, vector<8x632xbf16>,
    %46 = vector.extract_strided_slice %29 {offsets = [0, 38], sizes = [8, 632], strides = [1, 1]} : vector<8x672xbf16> to vector<8x632xbf16>
    %c64 = arith.constant 64 : index
    %c0_42 = arith.constant 0 : index
    %47 = vector.load %arg10[%c64, %c0_42] : memref<72x632xbf16, #tpu.memory_space<vmem>>, vector<8x632xbf16>
    tpu.vector_store %arg10[%c64, %c0_42], %46 {strides = array<i32>} : memref<72x632xbf16, #tpu.memory_space<vmem>>, vector<8x632xbf16>,
    %c0_43 = arith.constant 0 : index
    %c0_44 = arith.constant 0 : index
    %48 = vector.load %arg3[%c0_43, %c0_44] : memref<8x72xbf16, #tpu.memory_space<vmem>>, vector<8x72xbf16>
    %c0_45 = arith.constant 0 : index
    %c0_46 = arith.constant 0 : index
    %49 = vector.load %arg10[%c0_45, %c0_46] : memref<72x632xbf16, #tpu.memory_space<vmem>>, vector<72x632xbf16>
    %cst_47 = arith.constant dense<0.000000e+00> : vector<8x632xf32>
    %50 = tpu.matmul %48, %49, %cst_47 {dimension_numbers = #tpu.dot_dimension_numbers<[1], [0], [0], [1], [0, 0, 1, 1], [], []>} : vector<8x72xbf16>, vector<72x632xbf16>, vector<8x632xf32> -> vector<8x632xf32>
    %c0_48 = arith.constant 0 : index
    %c0_49 = arith.constant 0 : index
    %51 = vector.load %arg5[%c0_48, %c0_49] : memref<8x1xf32, #tpu.memory_space<vmem>>, vector<8x1xf32>
    %52 = vector.broadcast %51 : vector<8x1xf32> to vector<8x632xf32>
    %53 = arith.addf %50, %52 : vector<8x632xf32>
    %cst_50 = arith.constant 0.000000e+00 : f32
    %54 = vector.broadcast %cst_50 : f32 to vector<8x632xf32>
    %55 = arith.maximumf %53, %54 : vector<8x632xf32>
    %56 = arith.truncf %55 : vector<8x632xf32> to vector<8x632xbf16>
    %c0_51 = arith.constant 0 : index
    %c0_52 = arith.constant 0 : index
    %57 = vector.load %arg7[%c0_51, %c0_52] : memref<632x128xbf16, #tpu.memory_space<vmem>>, vector<632x128xbf16>
    %cst_53 = arith.constant dense<0.000000e+00> : vector<8x128xf32>
    %58 = tpu.matmul %56, %57, %cst_53 {dimension_numbers = #tpu.dot_dimension_numbers<[1], [0], [0], [1], [0, 0, 1, 1], [], []>} : vector<8x632xbf16>, vector<632x128xbf16>, vector<8x128xf32> -> vector<8x128xf32>
    %c0_54 = arith.constant 0 : index
    %c0_55 = arith.constant 0 : index
    %59 = vector.load %arg8[%c0_54, %c0_55] : memref<8x128xf32, #tpu.memory_space<vmem>>, vector<8x128xf32>
    tpu.vector_store %arg8[%c0_54, %c0_55], %58 {strides = array<i32>} : memref<8x128xf32, #tpu.memory_space<vmem>>, vector<8x128xf32>,
    return
  }
  func.func @transform_0(%arg0: i32) -> (i32, i32) {
    %c0_i32 = arith.constant 0 : i32
    %c0_i32_0 = arith.constant 0 : i32
    %c0_i32_1 = arith.constant 0 : i32
    return %c0_i32, %c0_i32_0 : i32, i32
  }
  func.func @transform_1(%arg0: i32) -> (i32, i32) {
    %c0_i32 = arith.constant 0 : i32
    %c0_i32_0 = arith.constant 0 : i32
    %c0_i32_1 = arith.constant 0 : i32
    return %c0_i32, %c0_i32_0 : i32, i32
  }
  func.func @transform_2(%arg0: i32) -> (i32, i32) {
    %c0_i32 = arith.constant 0 : i32
    %c0_i32_0 = arith.constant 0 : i32
    %c0_i32_1 = arith.constant 0 : i32
    return %c0_i32, %c0_i32_0 : i32, i32
  }
  func.func @transform_3(%arg0: i32) -> (i32, i32) {
    %c0_i32 = arith.constant 0 : i32
    %c0_i32_0 = arith.constant 0 : i32
    %c0_i32_1 = arith.constant 0 : i32
    return %c0_i32, %c0_i32_0 : i32, i32
  }
  func.func @transform_4(%arg0: i32) -> (i32, i32) {
    %c0_i32 = arith.constant 0 : i32
    %c0_i32_0 = arith.constant 0 : i32
    %c0_i32_1 = arith.constant 0 : i32
    return %c0_i32, %c0_i32_0 : i32, i32
  }
  func.func @transform_5(%arg0: i32) -> (i32, i32) {
    %c0_i32 = arith.constant 0 : i32
    %c0_i32_0 = arith.constant 0 : i32
    %c0_i32_1 = arith.constant 0 : i32
    return %c0_i32, %c0_i32_0 : i32, i32
  }
  func.func @transform_6(%arg0: i32) -> (i32, i32) {
    %c0_i32 = arith.constant 0 : i32
    %c0_i32_0 = arith.constant 0 : i32
    %c0_i32_1 = arith.constant 0 : i32
    return %c0_i32, %c0_i32_0 : i32, i32
  }
  func.func @transform_7(%arg0: i32) -> (i32, i32) {
    %c0_i32 = arith.constant 0 : i32
    %c0_i32_0 = arith.constant 0 : i32
    %c0_i32_1 = arith.constant 0 : i32
    return %c0_i32, %c0_i32_0 : i32, i32
  }
}

</mosaic_0001>

<llo_original>
// kernel: tpu_custom_call.1
$region0: #{tpu_custom_call.1}
  #allocation0 [shape = 'u32[]', space=smem, size = 0x4, offset = 0x4, fixed_abs, tag = 'smem constant byte address 0x4 - core index']
  #allocation1 [shape = 'u32[144,128]{1,0:T(1,128)}', space=vmem, size = 0x12000, scoped, tag = 'internal scratch']
  #allocation2 [shape = 'bf16[36,672]{1,0:T(8,128)(2,1)}', space=vmem, size = 0xf000, scoped, tag = 'scratch operand']
  #allocation3 [shape = 'bf16[72,632]{1,0:T(8,128)(2,1)}', space=vmem, size = 0x16800, scoped, tag = 'scratch operand']
  %s0 = inlined_call_operand.vmem [shape: bf16[4,710], index: 0, kind: input, shape index: {}]
  %s1 = inlined_call_operand.hbm [shape: bf16[8,36], index: 1, kind: input, shape index: {}]
  %s2 = inlined_call_operand.vmem [shape: bf16[8,72], index: 2, kind: input, shape index: {}]
  %s3 = inlined_call_operand.vmem [shape: f32[8,1], index: 3, kind: input, shape index: {}]
  %s4 = inlined_call_operand.vmem [shape: f32[8,1], index: 4, kind: input, shape index: {}]
  %s5 = inlined_call_operand.vmem [shape: f32[1,672], index: 5, kind: input, shape index: {}]
  %s6 = inlined_call_operand.hbm [shape: bf16[632,128], index: 6, kind: input, shape index: {}]
  %s7 = inlined_call_operand.hbm [shape: f32[8,128], index: 7, kind: output, shape index: {}]
  %s8 = sld [smem:[#allocation0]]
  $region46: #{tpu_custom_call.1} parent=0
    _
  %s10 = ssub.s32 1, %s8
  %s11 = scalar_select 0, %s10, %s8
  $region1: #{tpu_custom_call.1} parent=0
    #allocation4 [shape = 'u8[2048]{0}', space=vmem, size = 0x800, scoped, tag = 'input window, operand 1, single buffered']
    #allocation5 [shape = 's32[1]{0}', space=sflag, size = 0x4, scoped, tag = 'scoped memory for tpu_custom_call.1']
    #allocation6 [shape = 's32[1]{0}', space=sflag, size = 0x4, scoped, tag = 'scoped memory for tpu_custom_call.1']
    #allocation7 [shape = 'u8[161792]{0}', space=vmem, size = 0x27800, scoped, tag = 'input window, operand 6, single buffered']
    #allocation8 [shape = 's32[1]{0}', space=sflag, size = 0x4, scoped, tag = 'scoped memory for tpu_custom_call.1']
    #allocation9 [shape = 'u8[4096]{0}', space=vmem, size = 0x1000, scoped, tag = 'output window, operand 0, single buffered']
    %12 = vsyncpa [#allocation5], 0
    %13 = vsyncpa [#allocation8], 0
    %14 = vsyncpa [#allocation6], 0
    // Predicated region
    $region2: #{tpu_custom_call.1} parent=1 // pred_check
      _
    $region3: #{tpu_custom_call.1} parent=1 // pred_check_branch
      %16 = sbr.rel (0) target = $region5
    $region4: #{tpu_custom_call.1} parent=1 // pred_region
      _
    $region5: #{tpu_custom_call.1} parent=1 // pred_fallthru
      _
    // Predicated region
    $region6: #{tpu_custom_call.1} parent=1 // pred_check
      _
    $region7: #{tpu_custom_call.1} parent=1 // pred_check_branch
      %18 = sbr.rel (0) target = $region9
    $region8: #{tpu_custom_call.1} parent=1 // pred_region
      %s20 = ssub.s32 64, 64
      %21 = vsyncadd [#allocation5], %s20
      %s23 = sshll.u32 [#allocation4], 4
      %s24 = int_to_ptr.vmem [resolvable:$true] %s23
      %26 = dma.hbm_to_vmem [thread:$0]  %s1, 64, %s24, [#allocation5]
    $region9: #{tpu_custom_call.1} parent=1 // pred_fallthru
      _
    // Predicated region
    $region10: #{tpu_custom_call.1} parent=1 // pred_check
      _
    $region11: #{tpu_custom_call.1} parent=1 // pred_check_branch
      %28 = sbr.rel (0) target = $region13
    $region12: #{tpu_custom_call.1} parent=1 // pred_region
      _
    $region13: #{tpu_custom_call.1} parent=1 // pred_fallthru
      _
    // Predicated region
    $region14: #{tpu_custom_call.1} parent=1 // pred_check
      _
    $region15: #{tpu_custom_call.1} parent=1 // pred_check_branch
      %30 = sbr.rel (0) target = $region17
    $region16: #{tpu_custom_call.1} parent=1 // pred_region
      _
    $region17: #{tpu_custom_call.1} parent=1 // pred_fallthru
      _
    // Predicated region
    $region18: #{tpu_custom_call.1} parent=1 // pred_check
      _
    $region19: #{tpu_custom_call.1} parent=1 // pred_check_branch
      %32 = sbr.rel (0) target = $region21
    $region20: #{tpu_custom_call.1} parent=1 // pred_region
      _
    $region21: #{tpu_custom_call.1} parent=1 // pred_fallthru
      _
    // Predicated region
    $region22: #{tpu_custom_call.1} parent=1 // pred_check
      _
    $region23: #{tpu_custom_call.1} parent=1 // pred_check_branch
      %34 = sbr.rel (0) target = $region25
    $region24: #{tpu_custom_call.1} parent=1 // pred_region
      _
    $region25: #{tpu_custom_call.1} parent=1 // pred_fallthru
      _
    // Predicated region
    $region26: #{tpu_custom_call.1} parent=1 // pred_check
      _
    $region27: #{tpu_custom_call.1} parent=1 // pred_check_branch
      %36 = sbr.rel (0) target = $region29
    $region28: #{tpu_custom_call.1} parent=1 // pred_region
      %s38 = ssub.s32 5056, 5056
      %39 = vsyncadd [#allocation8], %s38
      %s40 = sshll.u32 [#allocation7], 4
      %s41 = int_to_ptr.vmem [resolvable:$true] %s40
      %46 = dma.hbm_to_vmem [thread:$0]  %s6, 5056, %s41, [#allocation8], 64, 64, 4
    $region29: #{tpu_custom_call.1} parent=1 // pred_fallthru
      _
    // Predicated region
    $region30: #{tpu_custom_call.1} parent=1 // pred_check
      _
    $region31: #{tpu_custom_call.1} parent=1 // pred_check_branch
      %48 = sbr.rel (0) target = $region33
    $region32: #{tpu_custom_call.1} parent=1 // pred_region
      %49 = dma.done [#allocation5], 64
    $region33: #{tpu_custom_call.1} parent=1 // pred_fallthru
      _
    // Predicated region
    $region34: #{tpu_custom_call.1} parent=1 // pred_check
      _
    $region35: #{tpu_custom_call.1} parent=1 // pred_check_branch
      %51 = sbr.rel (0) target = $region37
    $region36: #{tpu_custom_call.1} parent=1 // pred_region
      %52 = dma.done [#allocation8], 5056
    $region37: #{tpu_custom_call.1} parent=1 // pred_fallthru
      _
    %v54 = vld [vmem:[%s0] sm:$0xff]
    %v55 = vld [vmem:[%s0 + $0x8] sm:$0xf]
    %v58 = vcombine.high %v54, %v54
    %v60 = vunpack.c.l.s4 1983009808
    %v61 = vunpack.c.0.s8 %v60
    %v62 = vlaneseq
    %v63 = vshrl.u32 %v62, 7
    %v64 = vsub.s32 %v61, %v63
    %v65 = vrot.slane %v54, %v64
    %v67 = vunpack.c.l.s4 1983009808
    %v68 = vunpack.c.0.s8 %v67
    %v69 = vlaneseq
    %v70 = vshrl.u32 %v69, 7
    %v71 = vsub.s32 %v68, %v70
    %v72 = vrot.slane %v58, %v71
    %v74 = vunpack.c.l.s4 1983009808
    %v75 = vunpack.c.0.s8 %v74
    %v76 = vlaneseq
    %v77 = vshrl.u32 %v76, 7
    %v78 = vsub.s32 %v75, %v77
    %v79 = vrot.slane %v55, %v78
    %83 = vst [vmem:[#allocation2] sm:$0x33] %v65
    %84 = vst [vmem:[#allocation2 + $0x8] sm:$0x33] %v72
    %vm85 = vcmask 1041408
    %vm86 = vcmask 259076
    %vm87 = vmor %vm86, %vm85
    %88 = vst.msk [vmem:[#allocation2 + $0x10] sm:$0x33] %vm87, %v79
    %v89 = vld [vmem:[%s0] sm:$0xff]
    %v90 = vld [vmem:[%s0 + $0x8] sm:$0xf]
    %v93 = vcombine.low %v89, %v89
    %v95 = vunpack.c.l.s4 1983009808
    %v96 = vunpack.c.0.s8 %v95
    %v97 = vlaneseq
    %v98 = vshrl.u32 %v97, 7
    %v99 = vsub.s32 %v96, %v98
    %v100 = vrot.slane %v93, %v99
    %v102 = vunpack.c.l.s4 1983009808
    %v103 = vunpack.c.0.s8 %v102
    %v104 = vlaneseq
    %v105 = vshrl.u32 %v104, 7
    %v106 = vsub.s32 %v103, %v105
    %v107 = vrot.slane %v89, %v106
    %v108 = vcombine.low %v90, %v90
    %v110 = vunpack.c.l.s4 1983009808
    %v111 = vunpack.c.0.s8 %v110
    %v112 = vlaneseq
    %v113 = vshrl.u32 %v112, 7
    %v114 = vsub.s32 %v111, %v113
    %v115 = vrot.slane %v108, %v114
    %116 = vrot.lane.b32.xlu0 %v100, 127
    %v117 = vpop.permute.xlu0 %116
    %118 = vrot.lane.b32.xlu0 %v107, 127
    %v119 = vpop.permute.xlu0 %118
    %120 = vrot.lane.b32.xlu0 %v115, 127
    %v121 = vpop.permute.xlu0 %120
    %v122 = vrot.slane %v117, 4
    %v123 = vrot.slane %v119, 4
    %v124 = vrot.slane %v121, 4
    %vm125 = vcmask 1043456
    %v126 = vsel %vm125, %v122, %v123
    %vm127 = vcmask 1039360
    %v128 = vsel %vm127, %v117, %v126
    %v129 = vsel %vm125, %v123, %v124
    %v130 = vsel %vm127, %v119, %v129
    %v131 = vsel %vm127, %v121, %v124
    %135 = vst [vmem:[#allocation2] sm:$0xcc] %v128
    %136 = vst [vmem:[#allocation2 + $0x8] sm:$0xcc] %v130
    %vm137 = vcmask 1043458
    %vm138 = vcmask 261126
    %vm139 = vmor %vm138, %vm137
    %140 = vst.msk [vmem:[#allocation2 + $0x10] sm:$0xcc] %vm139, %v131
    %v141 = vld [vmem:[%s0] sm:$0xff]
    %v142 = vld [vmem:[%s0 + $0x8] sm:$0xf]
    %v145 = vcombine.high %v141, %v141
    %v147 = vunpack.c.l.s4 1983009808
    %v148 = vunpack.c.0.s8 %v147
    %v149 = vlaneseq
    %v150 = vshrl.u32 %v149, 7
    %v151 = vsub.s32 %v148, %v150
    %v152 = vrot.slane %v141, %v151
    %v154 = vunpack.c.l.s4 1983009808
    %v155 = vunpack.c.0.s8 %v154
    %v156 = vlaneseq
    %v157 = vshrl.u32 %v156, 7
    %v158 = vsub.s32 %v155, %v157
    %v159 = vrot.slane %v145, %v158
    %v161 = vunpack.c.l.s4 1983009808
    %v162 = vunpack.c.0.s8 %v161
    %v163 = vlaneseq
    %v164 = vshrl.u32 %v163, 7
    %v165 = vsub.s32 %v162, %v164
    %v166 = vrot.slane %v142, %v165
    %167 = vrot.lane.b32.xlu0 %v152, 126
    %v168 = vpop.permute.xlu0 %167
    %169 = vrot.lane.b32.xlu0 %v159, 126
    %v170 = vpop.permute.xlu0 %169
    %171 = vrot.lane.b32.xlu0 %v166, 126
    %v172 = vpop.permute.xlu0 %171
    %v173 = vrot.slane %v168, 4
    %v174 = vrot.slane %v170, 4
    %v175 = vrot.slane %v172, 4
    %v176 = vsel %vm125, %v173, %v174
    %vm177 = vcmask 1031168
    %v178 = vsel %vm177, %v168, %v176
    %v179 = vsel %vm125, %v174, %v175
    %v180 = vsel %vm177, %v170, %v179
    %v181 = vsel %vm177, %v172, %v175
    %185 = vst [vmem:[#allocation2 + $0x18] sm:$0x33] %v178
    %186 = vst [vmem:[#allocation2 + $0x20] sm:$0x33] %v180
    %187 = vst.msk [vmem:[#allocation2 + $0x28] sm:$0x33] %vm87, %v181
    %v188 = vld [vmem:[%s0] sm:$0xff]
    %v189 = vld [vmem:[%s0 + $0x8] sm:$0xf]
    %v192 = vcombine.low %v188, %v188
    %v194 = vunpack.c.l.s4 1983009808
    %v195 = vunpack.c.0.s8 %v194
    %v196 = vlaneseq
    %v197 = vshrl.u32 %v196, 7
    %v198 = vsub.s32 %v195, %v197
    %v199 = vrot.slane %v192, %v198
    %v201 = vunpack.c.l.s4 1983009808
    %v202 = vunpack.c.0.s8 %v201
    %v203 = vlaneseq
    %v204 = vshrl.u32 %v203, 7
    %v205 = vsub.s32 %v202, %v204
    %v206 = vrot.slane %v188, %v205
    %v207 = vcombine.low %v189, %v189
    %v209 = vunpack.c.l.s4 1983009808
    %v210 = vunpack.c.0.s8 %v209
    %v211 = vlaneseq
    %v212 = vshrl.u32 %v211, 7
    %v213 = vsub.s32 %v210, %v212
    %v214 = vrot.slane %v207, %v213
    %215 = vrot.lane.b32.xlu0 %v199, 110
    %v216 = vpop.permute.xlu0 %215
    %217 = vrot.lane.b32.xlu0 %v206, 110
    %v218 = vpop.permute.xlu0 %217
    %219 = vrot.lane.b32.xlu0 %v214, 110
    %v220 = vpop.permute.xlu0 %219
    %v221 = vrot.slane %v216, 4
    %v222 = vrot.slane %v218, 4
    %v223 = vrot.slane %v220, 4
    %v224 = vsel %vm125, %v221, %v222
    %vm225 = vcmask 900096
    %v226 = vsel %vm225, %v216, %v224
    %v227 = vsel %vm125, %v222, %v223
    %v228 = vsel %vm225, %v218, %v227
    %v229 = vsel %vm225, %v220, %v223
    %233 = vst [vmem:[#allocation2 + $0x18] sm:$0xcc] %v226
    %234 = vst [vmem:[#allocation2 + $0x20] sm:$0xcc] %v228
    %235 = vst.msk [vmem:[#allocation2 + $0x28] sm:$0xcc] %vm139, %v229
    %v236 = vld [vmem:[%s0] sm:$0xff]
    %v237 = vld [vmem:[%s0 + $0x8] sm:$0xf]
    %v240 = vcombine.high %v236, %v236
    %v242 = vunpack.c.l.s4 1983009808
    %v243 = vunpack.c.0.s8 %v242
    %v244 = vlaneseq
    %v245 = vshrl.u32 %v244, 7
    %v246 = vsub.s32 %v243, %v245
    %v247 = vrot.slane %v236, %v246
    %v249 = vunpack.c.l.s4 1983009808
    %v250 = vunpack.c.0.s8 %v249
    %v251 = vlaneseq
    %v252 = vshrl.u32 %v251, 7
    %v253 = vsub.s32 %v250, %v252
    %v254 = vrot.slane %v240, %v253
    %v256 = vunpack.c.l.s4 1983009808
    %v257 = vunpack.c.0.s8 %v256
    %v258 = vlaneseq
    %v259 = vshrl.u32 %v258, 7
    %v260 = vsub.s32 %v257, %v259
    %v261 = vrot.slane %v237, %v260
    %262 = vrot.lane.b32.xlu0 %v247, 109
    %v263 = vpop.permute.xlu0 %262
    %264 = vrot.lane.b32.xlu0 %v254, 109
    %v265 = vpop.permute.xlu0 %264
    %266 = vrot.lane.b32.xlu0 %v261, 109
    %v267 = vpop.permute.xlu0 %266
    %v268 = vrot.slane %v263, 4
    %v269 = vrot.slane %v265, 4
    %v270 = vrot.slane %v267, 4
    %v271 = vsel %vm125, %v268, %v269
    %vm272 = vcmask 891904
    %v273 = vsel %vm272, %v263, %v271
    %v274 = vsel %vm125, %v269, %v270
    %v275 = vsel %vm272, %v265, %v274
    %v276 = vsel %vm272, %v267, %v270
    %280 = vst [vmem:[#allocation2 + $0x30] sm:$0x33] %v273
    %281 = vst [vmem:[#allocation2 + $0x38] sm:$0x33] %v275
    %282 = vst.msk [vmem:[#allocation2 + $0x40] sm:$0x33] %vm87, %v276
    %v283 = vld [vmem:[%s0] sm:$0xff]
    %v284 = vld [vmem:[%s0 + $0x8] sm:$0xf]
    %v287 = vcombine.low %v283, %v283
    %v289 = vunpack.c.l.s4 1983009808
    %v290 = vunpack.c.0.s8 %v289
    %v291 = vlaneseq
    %v292 = vshrl.u32 %v291, 7
    %v293 = vsub.s32 %v290, %v292
    %v294 = vrot.slane %v287, %v293
    %v296 = vunpack.c.l.s4 1983009808
    %v297 = vunpack.c.0.s8 %v296
    %v298 = vlaneseq
    %v299 = vshrl.u32 %v298, 7
    %v300 = vsub.s32 %v297, %v299
    %v301 = vrot.slane %v283, %v300
    %v302 = vcombine.low %v284, %v284
    %v304 = vunpack.c.l.s4 1983009808
    %v305 = vunpack.c.0.s8 %v304
    %v306 = vlaneseq
    %v307 = vshrl.u32 %v306, 7
    %v308 = vsub.s32 %v305, %v307
    %v309 = vrot.slane %v302, %v308
    %310 = vrot.lane.b32.xlu0 %v294, 108
    %v311 = vpop.permute.xlu0 %310
    %312 = vrot.lane.b32.xlu0 %v301, 108
    %v313 = vpop.permute.xlu0 %312
    %314 = vrot.lane.b32.xlu0 %v309, 108
    %v315 = vpop.permute.xlu0 %314
    %v316 = vrot.slane %v311, 4
    %v317 = vrot.slane %v313, 4
    %v318 = vrot.slane %v315, 4
    %v319 = vsel %vm125, %v316, %v317
    %vm320 = vcmask 883712
    %v321 = vsel %vm320, %v311, %v319
    %v322 = vsel %vm125, %v317, %v318
    %v323 = vsel %vm320, %v313, %v322
    %v324 = vsel %vm320, %v315, %v318
    %328 = vst [vmem:[#allocation2 + $0x30] sm:$0xcc] %v321
    %329 = vst [vmem:[#allocation2 + $0x38] sm:$0xcc] %v323
    %330 = vst.msk [vmem:[#allocation2 + $0x40] sm:$0xcc] %vm139, %v324
    %v331 = vld [vmem:[%s0] sm:$0xff]
    %v332 = vld [vmem:[%s0 + $0x8] sm:$0xf]
    %v335 = vcombine.high %v331, %v331
    %v337 = vunpack.c.l.s4 1983009808
    %v338 = vunpack.c.0.s8 %v337
    %v339 = vlaneseq
    %v340 = vshrl.u32 %v339, 7
    %v341 = vsub.s32 %v338, %v340
    %v342 = vrot.slane %v331, %v341
    %v344 = vunpack.c.l.s4 1983009808
    %v345 = vunpack.c.0.s8 %v344
    %v346 = vlaneseq
    %v347 = vshrl.u32 %v346, 7
    %v348 = vsub.s32 %v345, %v347
    %v349 = vrot.slane %v335, %v348
    %v351 = vunpack.c.l.s4 1983009808
    %v352 = vunpack.c.0.s8 %v351
    %v353 = vlaneseq
    %v354 = vshrl.u32 %v353, 7
    %v355 = vsub.s32 %v352, %v354
    %v356 = vrot.slane %v332, %v355
    %357 = vrot.lane.b32.xlu0 %v342, 92
    %v358 = vpop.permute.xlu0 %357
    %359 = vrot.lane.b32.xlu0 %v349, 92
    %v360 = vpop.permute.xlu0 %359
    %361 = vrot.lane.b32.xlu0 %v356, 92
    %v362 = vpop.permute.xlu0 %361
    %v363 = vrot.slane %v358, 4
    %v364 = vrot.slane %v360, 4
    %v365 = vrot.slane %v362, 4
    %v366 = vsel %vm125, %v363, %v364
    %vm367 = vcmask 752640
    %v368 = vsel %vm367, %v358, %v366
    %v369 = vsel %vm125, %v364, %v365
    %v370 = vsel %vm367, %v360, %v369
    %v371 = vsel %vm367, %v362, %v365
    %375 = vst [vmem:[#allocation2 + $0x48] sm:$0x33] %v368
    %376 = vst [vmem:[#allocation2 + $0x50] sm:$0x33] %v370
    %377 = vst.msk [vmem:[#allocation2 + $0x58] sm:$0x33] %vm87, %v371
    %v378 = vld [vmem:[%s0] sm:$0xff]
    %v379 = vld [vmem:[%s0 + $0x8] sm:$0xf]
    %v382 = vcombine.low %v378, %v378
    %v384 = vunpack.c.l.s4 1983009808
    %v385 = vunpack.c.0.s8 %v384
    %v386 = vlaneseq
    %v387 = vshrl.u32 %v386, 7
    %v388 = vsub.s32 %v385, %v387
    %v389 = vrot.slane %v382, %v388
    %v391 = vunpack.c.l.s4 1983009808
    %v392 = vunpack.c.0.s8 %v391
    %v393 = vlaneseq
    %v394 = vshrl.u32 %v393, 7
    %v395 = vsub.s32 %v392, %v394
    %v396 = vrot.slane %v378, %v395
    %v397 = vcombine.low %v379, %v379
    %v399 = vunpack.c.l.s4 1983009808
    %v400 = vunpack.c.0.s8 %v399
    %v401 = vlaneseq
    %v402 = vshrl.u32 %v401, 7
    %v403 = vsub.s32 %v400, %v402
    %v404 = vrot.slane %v397, %v403
    %405 = vrot.lane.b32.xlu0 %v389, 91
    %v406 = vpop.permute.xlu0 %405
    %407 = vrot.lane.b32.xlu0 %v396, 91
    %v408 = vpop.permute.xlu0 %407
    %409 = vrot.lane.b32.xlu0 %v404, 91
    %v410 = vpop.permute.xlu0 %409
    %v411 = vrot.slane %v406, 4
    %v412 = vrot.slane %v408, 4
    %v413 = vrot.slane %v410, 4
    %v414 = vsel %vm125, %v411, %v412
    %vm415 = vcmask 744448
    %v416 = vsel %vm415, %v406, %v414
    %v417 = vsel %vm125, %v412, %v413
    %v418 = vsel %vm415, %v408, %v417
    %v419 = vsel %vm415, %v410, %v413
    %423 = vst [vmem:[#allocation2 + $0x48] sm:$0xcc] %v416
    %424 = vst [vmem:[#allocation2 + $0x50] sm:$0xcc] %v418
    %425 = vst.msk [vmem:[#allocation2 + $0x58] sm:$0xcc] %vm139, %v419
    %v426 = vld [vmem:[%s0] sm:$0xff]
    %v427 = vld [vmem:[%s0 + $0x8] sm:$0xf]
    %v430 = vcombine.high %v426, %v426
    %v432 = vunpack.c.l.s4 1983009808
    %v433 = vunpack.c.0.s8 %v432
    %v434 = vlaneseq
    %v435 = vshrl.u32 %v434, 7
    %v436 = vsub.s32 %v433, %v435
    %v437 = vrot.slane %v426, %v436
    %v439 = vunpack.c.l.s4 1983009808
    %v440 = vunpack.c.0.s8 %v439
    %v441 = vlaneseq
    %v442 = vshrl.u32 %v441, 7
    %v443 = vsub.s32 %v440, %v442
    %v444 = vrot.slane %v430, %v443
    %v446 = vunpack.c.l.s4 1983009808
    %v447 = vunpack.c.0.s8 %v446
    %v448 = vlaneseq
    %v449 = vshrl.u32 %v448, 7
    %v450 = vsub.s32 %v447, %v449
    %v451 = vrot.slane %v427, %v450
    %452 = vrot.lane.b32.xlu0 %v437, 90
    %v453 = vpop.permute.xlu0 %452
    %454 = vrot.lane.b32.xlu0 %v444, 90
    %v455 = vpop.permute.xlu0 %454
    %456 = vrot.lane.b32.xlu0 %v451, 90
    %v457 = vpop.permute.xlu0 %456
    %v458 = vrot.slane %v453, 4
    %v459 = vrot.slane %v455, 4
    %v460 = vrot.slane %v457, 4
    %v461 = vsel %vm125, %v458, %v459
    %vm462 = vcmask 736256
    %v463 = vsel %vm462, %v453, %v461
    %v464 = vsel %vm125, %v459, %v460
    %v465 = vsel %vm462, %v455, %v464
    %v466 = vsel %vm462, %v457, %v460
    %470 = vst [vmem:[#allocation2 + $0x60] sm:$0x33] %v463
    %471 = vst [vmem:[#allocation2 + $0x68] sm:$0x33] %v465
    %472 = vst.msk [vmem:[#allocation2 + $0x70] sm:$0x33] %vm87, %v466
    %v473 = vld [vmem:[#allocation4] sm:$0xf]
    %v474 = vld [vmem:[#allocation2] sm:$0xff]
    %v475 = vld [vmem:[#allocation2 + $0x8] sm:$0xff]
    %v476 = vld [vmem:[#allocation2 + $0x10] sm:$0xff]
    %v477 = vld [vmem:[#allocation2 + $0x18] sm:$0xff]
    %v478 = vld [vmem:[#allocation2 + $0x20] sm:$0xff]
    %v479 = vld [vmem:[#allocation2 + $0x28] sm:$0xff]
    %v480 = vld [vmem:[#allocation2 + $0x30] sm:$0xff]
    %v481 = vld [vmem:[#allocation2 + $0x38] sm:$0xff]
    %v482 = vld [vmem:[#allocation2 + $0x40] sm:$0xff]
    %v483 = vld [vmem:[#allocation2 + $0x48] sm:$0xff]
    %v484 = vld [vmem:[#allocation2 + $0x50] sm:$0xff]
    %v485 = vld [vmem:[#allocation2 + $0x58] sm:$0xff]
    %v486 = vld [vmem:[#allocation2 + $0x60] sm:$0x33]
    %v487 = vld [vmem:[#allocation2 + $0x68] sm:$0x33]
    %v488 = vld [vmem:[#allocation2 + $0x70] sm:$0x33]
    %v489 = vld [vmem:[%s3] sm:$0xff]
    %491 = vset.pattern.permute.xlu0 0
    %492 = vperm.xlu0 %491, %v489
    %v493 = vpop.permute.xlu0 %492
    %v510 = vunpack.c.l.b16 %v474
    %v511 = vunpack.c.h.b16 %v474
    %v512 = vunpack.c.l.b16 %v475
    %v513 = vunpack.c.h.b16 %v475
    %v514 = vunpack.c.l.b16 %v476
    %v515 = vunpack.c.h.b16 %v476
    %v516 = vunpack.c.l.b16 %v477
    %v517 = vunpack.c.h.b16 %v477
    %v518 = vunpack.c.l.b16 %v478
    %v519 = vunpack.c.h.b16 %v478
    %v520 = vunpack.c.l.b16 %v479
    %v521 = vunpack.c.h.b16 %v479
    %v522 = vunpack.c.l.b16 %v480
    %v523 = vunpack.c.h.b16 %v480
    %v524 = vunpack.c.l.b16 %v481
    %v525 = vunpack.c.h.b16 %v481
    %v526 = vunpack.c.l.b16 %v482
    %v527 = vunpack.c.h.b16 %v482
    %v528 = vunpack.c.l.b16 %v483
    %v529 = vunpack.c.h.b16 %v483
    %v530 = vunpack.c.l.b16 %v484
    %v531 = vunpack.c.h.b16 %v484
    %v532 = vunpack.c.l.b16 %v485
    %v533 = vunpack.c.h.b16 %v485
    %v534 = vunpack.c.l.b16 %v486
    %v535 = vunpack.c.h.b16 %v486
    %v536 = vunpack.c.l.b16 %v487
    %v537 = vunpack.c.h.b16 %v487
    %v538 = vunpack.c.l.b16 %v488
    %v539 = vunpack.c.h.b16 %v488
    %v540 = vpack.c.b16 %v516, %v510
    %v541 = vpack.c.b16 %v517, %v511
    %v542 = vpack.c.b16 %v518, %v512
    %v543 = vpack.c.b16 %v519, %v513
    %v544 = vpack.c.b16 %v520, %v514
    %v545 = vpack.c.b16 %v521, %v515
    %v546 = vpack.c.b16 %v528, %v522
    %v547 = vpack.c.b16 %v529, %v523
    %v548 = vpack.c.b16 %v530, %v524
    %v549 = vpack.c.b16 %v531, %v525
    %v550 = vpack.c.b16 %v532, %v526
    %v551 = vpack.c.b16 %v533, %v527
    %v552 = vpack.c.b16 %v534, %v534
    %v553 = vpack.c.b16 %v535, %v535
    %v554 = vpack.c.b16 %v536, %v536
    %v555 = vpack.c.b16 %v537, %v537
    %v556 = vpack.c.b16 %v538, %v538
    %v557 = vpack.c.b16 %v539, %v539
    %vm570 = vcmask 293888
    %v572 = vsel %vm570, %v473, 0
    %v575 = vsel %vm85, %v552, 0
    %v578 = vsel %vm85, %v553, 0
    %v581 = vsel %vm85, %v554, 0
    %v584 = vsel %vm85, %v555, 0
    %v587 = vsel %vm85, %v556, 0
    %v590 = vsel %vm85, %v557, 0
    %592 = vmatprep.subr.bf16.mxu0 %v541
    %593 = vmatpush1.bf16.msra.mxu0 %v540
    %594 = vmatprep.subr.bf16.mxu0 %v547
    %595 = vmatpush1.bf16.msra.mxu0 %v546
    %596 = vmatprep.subr.bf16.mxu0 %v578
    %597 = vmatpush1.bf16.msra.mxu0 %v575
    %598 = vmatprep.subr.bf16.mxu0 0
    %599 = vmatpush1.bf16.msra.mxu0 0
    %600 = vmatprep.subr.bf16.mxu0 0
    %601 = vmatpush1.bf16.msra.mxu0 0
    %602 = vmatprep.subr.bf16.mxu0 0
    %603 = vmatpush1.bf16.msra.mxu0 0
    %604 = vmatprep.subr.bf16.mxu0 0
    %605 = vmatpush1.bf16.msra.mxu0 0
    %606 = vmatprep.subr.bf16.mxu0 0
    %607 = vmatpush1.bf16.msra.mxu0 0
    %608 = vmatprep.subr.bf16.mxu0 0
    %609 = vmatpush1.bf16.msra.mxu0 0
    %610 = vmatprep.subr.bf16.mxu0 0
    %611 = vmatpush1.bf16.msra.mxu0 0
    %612 = vmatprep.subr.bf16.mxu0 0
    %613 = vmatpush1.bf16.msra.mxu0 0
    %614 = vmatprep.subr.bf16.mxu0 0
    %615 = vmatpush1.bf16.msra.mxu0 0
    %616 = vmatprep.subr.bf16.mxu0 0
    %617 = vmatpush1.bf16.msra.mxu0 0
    %618 = vmatprep.subr.bf16.mxu0 0
    %619 = vmatpush1.bf16.msra.mxu0 0
    %620 = vmatprep.subr.bf16.mxu0 0
    %621 = vmatpush1.bf16.msra.mxu0 0
    %622 = vmatprep.subr.bf16.mxu0 0
    %623 = vmatpush1.bf16.msra.mxu0 0
    %624 = vmatprep.mubr.bf16.mxu0 0
    %625 = vmatmul.mubr.bf16.gmra.mrb[0].mxu0 %v572
    %v626 = vpop.f32.mrb[0].mxu0
    %v627 = vadd.f32 %v493, %v626
    %v628 = vpop.f32.mrb[0].mxu0
    %v629 = vadd.f32 %v493, %v628
    %v630 = vpop.f32.mrb[0].mxu0
    %v631 = vpop.f32.mrb[0].mxu0
    %632 = vdwg.mxu0
    %633 = vmatprep.subr.bf16.mxu0 %v543
    %634 = vmatpush1.bf16.msra.mxu0 %v542
    %635 = vmatprep.subr.bf16.mxu0 %v549
    %636 = vmatpush1.bf16.msra.mxu0 %v548
    %637 = vmatprep.subr.bf16.mxu0 %v584
    %638 = vmatpush1.bf16.msra.mxu0 %v581
    %639 = vmatprep.subr.bf16.mxu0 0
    %640 = vmatpush1.bf16.msra.mxu0 0
    %641 = vmatprep.subr.bf16.mxu0 0
    %642 = vmatpush1.bf16.msra.mxu0 0
    %643 = vmatprep.subr.bf16.mxu0 0
    %644 = vmatpush1.bf16.msra.mxu0 0
    %645 = vmatprep.subr.bf16.mxu0 0
    %646 = vmatpush1.bf16.msra.mxu0 0
    %647 = vmatprep.subr.bf16.mxu0 0
    %648 = vmatpush1.bf16.msra.mxu0 0
    %649 = vmatprep.subr.bf16.mxu0 0
    %650 = vmatpush1.bf16.msra.mxu0 0
    %651 = vmatprep.subr.bf16.mxu0 0
    %652 = vmatpush1.bf16.msra.mxu0 0
    %653 = vmatprep.subr.bf16.mxu0 0
    %654 = vmatpush1.bf16.msra.mxu0 0
    %655 = vmatprep.subr.bf16.mxu0 0
    %656 = vmatpush1.bf16.msra.mxu0 0
    %657 = vmatprep.subr.bf16.mxu0 0
    %658 = vmatpush1.bf16.msra.mxu0 0
    %659 = vmatprep.subr.bf16.mxu0 0
    %660 = vmatpush1.bf16.msra.mxu0 0
    %661 = vmatprep.subr.bf16.mxu0 0
    %662 = vmatpush1.bf16.msra.mxu0 0
    %663 = vmatprep.subr.bf16.mxu0 0
    %664 = vmatpush1.bf16.msra.mxu0 0
    %665 = vmatprep.mubr.bf16.mxu0 0
    %666 = vmatmul.mubr.bf16.gmra.mrb[0].mxu0 %v572
    %v667 = vpop.f32.mrb[0].mxu0
    %v668 = vadd.f32 %v493, %v667
    %v669 = vpop.f32.mrb[0].mxu0
    %v670 = vadd.f32 %v493, %v669
    %v671 = vpop.f32.mrb[0].mxu0
    %v672 = vpop.f32.mrb[0].mxu0
    %673 = vdwg.mxu0
    %674 = vmatprep.subr.bf16.mxu0 %v545
    %675 = vmatpush1.bf16.msra.mxu0 %v544
    %676 = vmatprep.subr.bf16.mxu0 %v551
    %677 = vmatpush1.bf16.msra.mxu0 %v550
    %678 = vmatprep.subr.bf16.mxu0 %v590
    %679 = vmatpush1.bf16.msra.mxu0 %v587
    %680 = vmatprep.subr.bf16.mxu0 0
    %681 = vmatpush1.bf16.msra.mxu0 0
    %682 = vmatprep.subr.bf16.mxu0 0
    %683 = vmatpush1.bf16.msra.mxu0 0
    %684 = vmatprep.subr.bf16.mxu0 0
    %685 = vmatpush1.bf16.msra.mxu0 0
    %686 = vmatprep.subr.bf16.mxu0 0
    %687 = vmatpush1.bf16.msra.mxu0 0
    %688 = vmatprep.subr.bf16.mxu0 0
    %689 = vmatpush1.bf16.msra.mxu0 0
    %690 = vmatprep.subr.bf16.mxu0 0
    %691 = vmatpush1.bf16.msra.mxu0 0
    %692 = vmatprep.subr.bf16.mxu0 0
    %693 = vmatpush1.bf16.msra.mxu0 0
    %694 = vmatprep.subr.bf16.mxu0 0
    %695 = vmatpush1.bf16.msra.mxu0 0
    %696 = vmatprep.subr.bf16.mxu0 0
    %697 = vmatpush1.bf16.msra.mxu0 0
    %698 = vmatprep.subr.bf16.mxu0 0
    %699 = vmatpush1.bf16.msra.mxu0 0
    %700 = vmatprep.subr.bf16.mxu0 0
    %701 = vmatpush1.bf16.msra.mxu0 0
    %702 = vmatprep.subr.bf16.mxu0 0
    %703 = vmatpush1.bf16.msra.mxu0 0
    %704 = vmatprep.subr.bf16.mxu0 0
    %705 = vmatpush1.bf16.msra.mxu0 0
    %706 = vmatprep.mubr.bf16.mxu0 0
    %707 = vmatmul.mubr.bf16.gmra.mrb[0].mxu0 %v572
    %v708 = vpop.f32.mrb[0].mxu0
    %v709 = vadd.f32 %v493, %v708
    %v710 = vpop.f32.mrb[0].mxu0
    %v711 = vadd.f32 %v493, %v710
    %v712 = vpop.f32.mrb[0].mxu0
    %v713 = vpop.f32.mrb[0].mxu0
    %714 = vdwg.mxu0
    %v715 = vmax.f32 %v627, 0.0
    %v716 = vmax.f32 %v629, 0.0
    %v717 = vmax.f32 %v668, 0.0
    %v718 = vmax.f32 %v670, 0.0
    %v719 = vmax.f32 %v709, 0.0
    %v720 = vmax.f32 %v711, 0.0
    %v721 = vld [vmem:[%s5] sm:$0x3f]
    %v723 = vlaneseq
    %v724 = vshrl.u32 %v723, 7
    %v725 = vsub.s32 0, %v724
    %v726 = vrot.slane %v721, %v725
    %v727 = vlaneseq
    %v728 = vshrl.u32 %v727, 7
    %v729 = vsub.s32 1, %v728
    %v730 = vrot.slane %v721, %v729
    %v731 = vlaneseq
    %v732 = vshrl.u32 %v731, 7
    %v733 = vsub.s32 2, %v732
    %v734 = vrot.slane %v721, %v733
    %v735 = vlaneseq
    %v736 = vshrl.u32 %v735, 7
    %v737 = vsub.s32 3, %v736
    %v738 = vrot.slane %v721, %v737
    %v739 = vlaneseq
    %v740 = vshrl.u32 %v739, 7
    %v741 = vsub.s32 4, %v740
    %v742 = vrot.slane %v721, %v741
    %v743 = vlaneseq
    %v744 = vshrl.u32 %v743, 7
    %v745 = vsub.s32 5, %v744
    %v746 = vrot.slane %v721, %v745
    %v753 = vmul.f32 %v715, %v726
    %v754 = vmul.f32 %v716, %v730
    %v755 = vmul.f32 %v717, %v734
    %v756 = vmul.f32 %v718, %v738
    %v757 = vmul.f32 %v719, %v742
    %v758 = vmul.f32 %v720, %v746
    %v759 = vpack.c.bf16 %v753, %v753
    %v760 = vpack.c.bf16 %v754, %v754
    %v761 = vpack.c.bf16 %v755, %v755
    %v762 = vpack.c.bf16 %v756, %v756
    %v763 = vpack.c.bf16 %v757, %v757
    %v764 = vpack.c.bf16 %v758, %v758
    %v770 = vunpack.c.l.b16 %v759
    %v771 = vunpack.c.l.b16 %v760
    %v772 = vunpack.c.l.b16 %v761
    %v773 = vunpack.c.l.b16 %v762
    %v774 = vunpack.c.l.b16 %v763
    %v775 = vpack.c.b16 %v771, %v770
    %v776 = vpack.c.b16 %v773, %v772
    %v777 = vpack.c.b16 %v774, %v774
    %781 = vst [vmem:[#allocation3] sm:$0xff] %v775
    %782 = vst [vmem:[#allocation3 + $0x8] sm:$0xff] %v776
    %vm783 = vcmask 977920
    %784 = vst.msk [vmem:[#allocation3 + $0x10] sm:$0xf] %vm783, %v777
    %785 = vrot.lane.b32.xlu0 %v775, 127
    %v786 = vpop.permute.xlu0 %785
    %787 = vrot.lane.b32.xlu0 %v776, 127
    %v788 = vpop.permute.xlu0 %787
    %789 = vrot.lane.b32.xlu0 %v777, 127
    %v790 = vpop.permute.xlu0 %789
    %v791 = vrot.slane %v786, 4
    %v792 = vrot.slane %v788, 4
    %v793 = vrot.slane %v790, 4
    %v794 = vsel %vm125, %v791, %v792
    %v795 = vsel %vm127, %v786, %v794
    %v796 = vsel %vm125, %v792, %v793
    %v797 = vsel %vm127, %v788, %v796
    %801 = vst [vmem:[#allocation3 + $0x14] sm:$0xff] %v795
    %802 = vst [vmem:[#allocation3 + $0x1c] sm:$0xff] %v797
    %803 = vst.msk [vmem:[#allocation3 + $0x24] sm:$0xf] %vm783, %v790
    %804 = vrot.lane.b32.xlu0 %v775, 126
    %v805 = vpop.permute.xlu0 %804
    %806 = vrot.lane.b32.xlu0 %v776, 126
    %v807 = vpop.permute.xlu0 %806
    %808 = vrot.lane.b32.xlu0 %v777, 126
    %v809 = vpop.permute.xlu0 %808
    %v810 = vrot.slane %v805, 4
    %v811 = vrot.slane %v807, 4
    %v812 = vrot.slane %v809, 4
    %v813 = vsel %vm125, %v810, %v811
    %v814 = vsel %vm177, %v805, %v813
    %v815 = vsel %vm125, %v811, %v812
    %v816 = vsel %vm177, %v807, %v815
    %820 = vst [vmem:[#allocation3 + $0x28] sm:$0xff] %v814
    %821 = vst [vmem:[#allocation3 + $0x30] sm:$0xff] %v816
    %822 = vst.msk [vmem:[#allocation3 + $0x38] sm:$0xf] %vm783, %v809
    %v824 = vunpack.c.l.b16 %v764
    %v825 = vpack.c.b16 %v824, %v774
    %826 = vrot.lane.b32.xlu0 %v775, 110
    %v827 = vpop.permute.xlu0 %826
    %828 = vrot.lane.b32.xlu0 %v776, 110
    %v829 = vpop.permute.xlu0 %828
    %830 = vrot.lane.b32.xlu0 %v825, 110
    %v831 = vpop.permute.xlu0 %830
    %v832 = vrot.slane %v827, 4
    %v833 = vrot.slane %v829, 4
    %v834 = vrot.slane %v831, 4
    %v835 = vsel %vm125, %v832, %v833
    %v836 = vsel %vm225, %v827, %v835
    %v837 = vsel %vm125, %v833, %v834
    %v838 = vsel %vm225, %v829, %v837
    %v839 = vsel %vm225, %v831, %v834
    %843 = vst [vmem:[#allocation3 + $0x3c] sm:$0xff] %v836
    %844 = vst [vmem:[#allocation3 + $0x44] sm:$0xff] %v838
    %845 = vst.msk [vmem:[#allocation3 + $0x4c] sm:$0xf] %vm783, %v839
    %846 = vrot.lane.b32.xlu0 %v775, 109
    %v847 = vpop.permute.xlu0 %846
    %848 = vrot.lane.b32.xlu0 %v776, 109
    %v849 = vpop.permute.xlu0 %848
    %850 = vrot.lane.b32.xlu0 %v825, 109
    %v851 = vpop.permute.xlu0 %850
    %v852 = vrot.slane %v847, 4
    %v853 = vrot.slane %v849, 4
    %v854 = vrot.slane %v851, 4
    %v855 = vsel %vm125, %v852, %v853
    %v856 = vsel %vm272, %v847, %v855
    %v857 = vsel %vm125, %v853, %v854
    %v858 = vsel %vm272, %v849, %v857
    %v859 = vsel %vm272, %v851, %v854
    %863 = vst [vmem:[#allocation3 + $0x50] sm:$0xff] %v856
    %864 = vst [vmem:[#allocation3 + $0x58] sm:$0xff] %v858
    %865 = vst.msk [vmem:[#allocation3 + $0x60] sm:$0xf] %vm783, %v859
    %866 = vrot.lane.b32.xlu0 %v775, 108
    %v867 = vpop.permute.xlu0 %866
    %868 = vrot.lane.b32.xlu0 %v776, 108
    %v869 = vpop.permute.xlu0 %868
    %870 = vrot.lane.b32.xlu0 %v825, 108
    %v871 = vpop.permute.xlu0 %870
    %v872 = vrot.slane %v867, 4
    %v873 = vrot.slane %v869, 4
    %v874 = vrot.slane %v871, 4
    %v875 = vsel %vm125, %v872, %v873
    %v876 = vsel %vm320, %v867, %v875
    %v877 = vsel %vm125, %v873, %v874
    %v878 = vsel %vm320, %v869, %v877
    %v879 = vsel %vm320, %v871, %v874
    %883 = vst [vmem:[#allocation3 + $0x64] sm:$0xff] %v876
    %884 = vst [vmem:[#allocation3 + $0x6c] sm:$0xff] %v878
    %885 = vst.msk [vmem:[#allocation3 + $0x74] sm:$0xf] %vm783, %v879
    %886 = vrot.lane.b32.xlu0 %v775, 92
    %v887 = vpop.permute.xlu0 %886
    %888 = vrot.lane.b32.xlu0 %v776, 92
    %v889 = vpop.permute.xlu0 %888
    %890 = vrot.lane.b32.xlu0 %v825, 92
    %v891 = vpop.permute.xlu0 %890
    %v892 = vrot.slane %v887, 4
    %v893 = vrot.slane %v889, 4
    %v894 = vrot.slane %v891, 4
    %v895 = vsel %vm125, %v892, %v893
    %v896 = vsel %vm367, %v887, %v895
    %v897 = vsel %vm125, %v893, %v894
    %v898 = vsel %vm367, %v889, %v897
    %v899 = vsel %vm367, %v891, %v894
    %903 = vst [vmem:[#allocation3 + $0x78] sm:$0xff] %v896
    %904 = vst [vmem:[#allocation3 + $0x80] sm:$0xff] %v898
    %905 = vst.msk [vmem:[#allocation3 + $0x88] sm:$0xf] %vm783, %v899
    %906 = vrot.lane.b32.xlu0 %v775, 91
    %v907 = vpop.permute.xlu0 %906
    %908 = vrot.lane.b32.xlu0 %v776, 91
    %v909 = vpop.permute.xlu0 %908
    %910 = vrot.lane.b32.xlu0 %v825, 91
    %v911 = vpop.permute.xlu0 %910
    %v912 = vrot.slane %v907, 4
    %v913 = vrot.slane %v909, 4
    %v914 = vrot.slane %v911, 4
    %v915 = vsel %vm125, %v912, %v913
    %v916 = vsel %vm415, %v907, %v915
    %v917 = vsel %vm125, %v913, %v914
    %v918 = vsel %vm415, %v909, %v917
    %v919 = vsel %vm415, %v911, %v914
    %923 = vst [vmem:[#allocation3 + $0x8c] sm:$0xff] %v916
    %924 = vst [vmem:[#allocation3 + $0x94] sm:$0xff] %v918
    %925 = vst.msk [vmem:[#allocation3 + $0x9c] sm:$0xf] %vm783, %v919
    %926 = vrot.lane.b32.xlu0 %v775, 90
    %v927 = vpop.permute.xlu0 %926
    %928 = vrot.lane.b32.xlu0 %v776, 90
    %v929 = vpop.permute.xlu0 %928
    %930 = vrot.lane.b32.xlu0 %v825, 90
    %v931 = vpop.permute.xlu0 %930
    %v932 = vrot.slane %v927, 4
    %v933 = vrot.slane %v929, 4
    %v934 = vrot.slane %v931, 4
    %v935 = vsel %vm125, %v932, %v933
    %v936 = vsel %vm462, %v927, %v935
    %v937 = vsel %vm125, %v933, %v934
    %v938 = vsel %vm462, %v929, %v937
    %v939 = vsel %vm462, %v931, %v934
    %943 = vst [vmem:[#allocation3 + $0xa0] sm:$0xff] %v936
    %944 = vst [vmem:[#allocation3 + $0xa8] sm:$0xff] %v938
    %945 = vst.msk [vmem:[#allocation3 + $0xb0] sm:$0xf] %vm783, %v939
    %v946 = vld [vmem:[%s2] sm:$0xf]
    %v947 = vld [vmem:[#allocation3] sm:$0xff]
    %v948 = vld [vmem:[#allocation3 + $0x8] sm:$0xff]
    %v949 = vld [vmem:[#allocation3 + $0x10] sm:$0xf]
    %v950 = vld [vmem:[#allocation3 + $0x14] sm:$0xff]
    %v951 = vld [vmem:[#allocation3 + $0x1c] sm:$0xff]
    %v952 = vld [vmem:[#allocation3 + $0x24] sm:$0xf]
    %v953 = vld [vmem:[#allocation3 + $0x28] sm:$0xff]
    %v954 = vld [vmem:[#allocation3 + $0x30] sm:$0xff]
    %v955 = vld [vmem:[#allocation3 + $0x38] sm:$0xf]
    %v956 = vld [vmem:[#allocation3 + $0x3c] sm:$0xff]
    %v957 = vld [vmem:[#allocation3 + $0x44] sm:$0xff]
    %v958 = vld [vmem:[#allocation3 + $0x4c] sm:$0xf]
    %v959 = vld [vmem:[#allocation3 + $0x50] sm:$0xff]
    %v960 = vld [vmem:[#allocation3 + $0x58] sm:$0xff]
    %v961 = vld [vmem:[#allocation3 + $0x60] sm:$0xf]
    %v962 = vld [vmem:[#allocation3 + $0x64] sm:$0xff]
    %v963 = vld [vmem:[#allocation3 + $0x6c] sm:$0xff]
    %v964 = vld [vmem:[#allocation3 + $0x74] sm:$0xf]
    %v965 = vld [vmem:[#allocation3 + $0x78] sm:$0xff]
    %v966 = vld [vmem:[#allocation3 + $0x80] sm:$0xff]
    %v967 = vld [vmem:[#allocation3 + $0x88] sm:$0xf]
    %v968 = vld [vmem:[#allocation3 + $0x8c] sm:$0xff]
    %v969 = vld [vmem:[#allocation3 + $0x94] sm:$0xff]
    %v970 = vld [vmem:[#allocation3 + $0x9c] sm:$0xf]
    %v971 = vld [vmem:[#allocation3 + $0xa0] sm:$0xff]
    %v972 = vld [vmem:[#allocation3 + $0xa8] sm:$0xff]
    %v973 = vld [vmem:[#allocation3 + $0xb0] sm:$0xf]
    %v974 = vld [vmem:[%s4] sm:$0xff]
    %976 = vset.pattern.permute.xlu0 0
    %977 = vperm.xlu0 %976, %v974
    %v978 = vpop.permute.xlu0 %977
    %v1007 = vunpack.c.l.b16 %v947
    %v1008 = vunpack.c.h.b16 %v947
    %v1009 = vunpack.c.l.b16 %v948
    %v1010 = vunpack.c.h.b16 %v948
    %v1011 = vunpack.c.l.b16 %v949
    %v1012 = vunpack.c.l.b16 %v950
    %v1013 = vunpack.c.h.b16 %v950
    %v1014 = vunpack.c.l.b16 %v951
    %v1015 = vunpack.c.h.b16 %v951
    %v1016 = vunpack.c.l.b16 %v952
    %v1017 = vunpack.c.l.b16 %v953
    %v1018 = vunpack.c.h.b16 %v953
    %v1019 = vunpack.c.l.b16 %v954
    %v1020 = vunpack.c.h.b16 %v954
    %v1021 = vunpack.c.l.b16 %v955
    %v1022 = vunpack.c.l.b16 %v956
    %v1023 = vunpack.c.h.b16 %v956
    %v1024 = vunpack.c.l.b16 %v957
    %v1025 = vunpack.c.h.b16 %v957
    %v1026 = vunpack.c.l.b16 %v958
    %v1027 = vunpack.c.l.b16 %v959
    %v1028 = vunpack.c.h.b16 %v959
    %v1029 = vunpack.c.l.b16 %v960
    %v1030 = vunpack.c.h.b16 %v960
    %v1031 = vunpack.c.l.b16 %v961
    %v1032 = vunpack.c.l.b16 %v962
    %v1033 = vunpack.c.h.b16 %v962
    %v1034 = vunpack.c.l.b16 %v963
    %v1035 = vunpack.c.h.b16 %v963
    %v1036 = vunpack.c.l.b16 %v964
    %v1037 = vunpack.c.l.b16 %v965
    %v1038 = vunpack.c.h.b16 %v965
    %v1039 = vunpack.c.l.b16 %v966
    %v1040 = vunpack.c.h.b16 %v966
    %v1041 = vunpack.c.l.b16 %v967
    %v1042 = vunpack.c.l.b16 %v968
    %v1043 = vunpack.c.h.b16 %v968
    %v1044 = vunpack.c.l.b16 %v969
    %v1045 = vunpack.c.h.b16 %v969
    %v1046 = vunpack.c.l.b16 %v970
    %v1047 = vunpack.c.l.b16 %v971
    %v1048 = vunpack.c.h.b16 %v971
    %v1049 = vunpack.c.l.b16 %v972
    %v1050 = vunpack.c.h.b16 %v972
    %v1051 = vunpack.c.l.b16 %v973
    %v1052 = vpack.c.b16 %v1012, %v1007
    %v1053 = vpack.c.b16 %v1013, %v1008
    %v1054 = vpack.c.b16 %v1014, %v1009
    %v1055 = vpack.c.b16 %v1015, %v1010
    %v1056 = vpack.c.b16 %v1016, %v1011
    %v1057 = vpack.c.b16 %v1022, %v1017
    %v1058 = vpack.c.b16 %v1023, %v1018
    %v1059 = vpack.c.b16 %v1024, %v1019
    %v1060 = vpack.c.b16 %v1025, %v1020
    %v1061 = vpack.c.b16 %v1026, %v1021
    %v1062 = vpack.c.b16 %v1032, %v1027
    %v1063 = vpack.c.b16 %v1033, %v1028
    %v1064 = vpack.c.b16 %v1034, %v1029
    %v1065 = vpack.c.b16 %v1035, %v1030
    %v1066 = vpack.c.b16 %v1036, %v1031
    %v1067 = vpack.c.b16 %v1042, %v1037
    %v1068 = vpack.c.b16 %v1043, %v1038
    %v1069 = vpack.c.b16 %v1044, %v1039
    %v1070 = vpack.c.b16 %v1045, %v1040
    %v1071 = vpack.c.b16 %v1046, %v1041
    %v1072 = vpack.c.b16 %v1047, %v1047
    %v1073 = vpack.c.b16 %v1048, %v1048
    %v1074 = vpack.c.b16 %v1049, %v1049
    %v1075 = vpack.c.b16 %v1050, %v1050
    %v1076 = vpack.c.b16 %v1051, %v1051
    %vm1097 = vcmask 588800
    %v1099 = vsel %vm1097, %v946, 0
    %vm1101 = vcmask 1043456
    %v1103 = vsel %vm1101, %v1072, 0
    %v1106 = vsel %vm1101, %v1073, 0
    %v1109 = vsel %vm1101, %v1074, 0
    %v1112 = vsel %vm1101, %v1075, 0
    %v1115 = vsel %vm1101, %v1076, 0
    %1117 = vmatprep.subr.bf16.mxu0 %v1053
    %1118 = vmatpush1.bf16.msra.mxu0 %v1052
    %1119 = vmatprep.subr.bf16.mxu0 %v1058
    %1120 = vmatpush1.bf16.msra.mxu0 %v1057
    %1121 = vmatprep.subr.bf16.mxu0 %v1063
    %1122 = vmatpush1.bf16.msra.mxu0 %v1062
    %1123 = vmatprep.subr.bf16.mxu0 %v1068
    %1124 = vmatpush1.bf16.msra.mxu0 %v1067
    %1125 = vmatprep.subr.bf16.mxu0 %v1106
    %1126 = vmatpush1.bf16.msra.mxu0 %v1103
    %1127 = vmatprep.subr.bf16.mxu0 0
    %1128 = vmatpush1.bf16.msra.mxu0 0
    %1129 = vmatprep.subr.bf16.mxu0 0
    %1130 = vmatpush1.bf16.msra.mxu0 0
    %1131 = vmatprep.subr.bf16.mxu0 0
    %1132 = vmatpush1.bf16.msra.mxu0 0
    %1133 = vmatprep.subr.bf16.mxu0 0
    %1134 = vmatpush1.bf16.msra.mxu0 0
    %1135 = vmatprep.subr.bf16.mxu0 0
    %1136 = vmatpush1.bf16.msra.mxu0 0
    %1137 = vmatprep.subr.bf16.mxu0 0
    %1138 = vmatpush1.bf16.msra.mxu0 0
    %1139 = vmatprep.subr.bf16.mxu0 0
    %1140 = vmatpush1.bf16.msra.mxu0 0
    %1141 = vmatprep.subr.bf16.mxu0 0
    %1142 = vmatpush1.bf16.msra.mxu0 0
    %1143 = vmatprep.subr.bf16.mxu0 0
    %1144 = vmatpush1.bf16.msra.mxu0 0
    %1145 = vmatprep.subr.bf16.mxu0 0
    %1146 = vmatpush1.bf16.msra.mxu0 0
    %1147 = vmatprep.subr.bf16.mxu0 0
    %1148 = vmatpush1.bf16.msra.mxu0 0
    %1149 = vmatprep.mubr.bf16.mxu0 0
    %1150 = vmatmul.mubr.bf16.gmra.mrb[0].mxu0 %v1099
    %v1151 = vpop.f32.mrb[0].mxu0
    %v1152 = vadd.f32 %v978, %v1151
    %v1153 = vpop.f32.mrb[0].mxu0
    %v1154 = vadd.f32 %v978, %v1153
    %v1155 = vpop.f32.mrb[0].mxu0
    %v1156 = vpop.f32.mrb[0].mxu0
    %1157 = vdwg.mxu0
    %1158 = vmatprep.subr.bf16.mxu0 %v1055
    %1159 = vmatpush1.bf16.msra.mxu0 %v1054
    %1160 = vmatprep.subr.bf16.mxu0 %v1060
    %1161 = vmatpush1.bf16.msra.mxu0 %v1059
    %1162 = vmatprep.subr.bf16.mxu0 %v1065
    %1163 = vmatpush1.bf16.msra.mxu0 %v1064
    %1164 = vmatprep.subr.bf16.mxu0 %v1070
    %1165 = vmatpush1.bf16.msra.mxu0 %v1069
    %1166 = vmatprep.subr.bf16.mxu0 %v1112
    %1167 = vmatpush1.bf16.msra.mxu0 %v1109
    %1168 = vmatprep.subr.bf16.mxu0 0
    %1169 = vmatpush1.bf16.msra.mxu0 0
    %1170 = vmatprep.subr.bf16.mxu0 0
    %1171 = vmatpush1.bf16.msra.mxu0 0
    %1172 = vmatprep.subr.bf16.mxu0 0
    %1173 = vmatpush1.bf16.msra.mxu0 0
    %1174 = vmatprep.subr.bf16.mxu0 0
    %1175 = vmatpush1.bf16.msra.mxu0 0
    %1176 = vmatprep.subr.bf16.mxu0 0
    %1177 = vmatpush1.bf16.msra.mxu0 0
    %1178 = vmatprep.subr.bf16.mxu0 0
    %1179 = vmatpush1.bf16.msra.mxu0 0
    %1180 = vmatprep.subr.bf16.mxu0 0
    %1181 = vmatpush1.bf16.msra.mxu0 0
    %1182 = vmatprep.subr.bf16.mxu0 0
    %1183 = vmatpush1.bf16.msra.mxu0 0
    %1184 = vmatprep.subr.bf16.mxu0 0
    %1185 = vmatpush1.bf16.msra.mxu0 0
    %1186 = vmatprep.subr.bf16.mxu0 0
    %1187 = vmatpush1.bf16.msra.mxu0 0
    %1188 = vmatprep.subr.bf16.mxu0 0
    %1189 = vmatpush1.bf16.msra.mxu0 0
    %1190 = vmatprep.mubr.bf16.mxu0 0
    %1191 = vmatmul.mubr.bf16.gmra.mrb[0].mxu0 %v1099
    %v1192 = vpop.f32.mrb[0].mxu0
    %v1193 = vadd.f32 %v978, %v1192
    %v1194 = vpop.f32.mrb[0].mxu0
    %v1195 = vadd.f32 %v978, %v1194
    %v1196 = vpop.f32.mrb[0].mxu0
    %v1197 = vpop.f32.mrb[0].mxu0
    %1198 = vdwg.mxu0
    %1199 = vmatprep.subr.bf16.mxu0 0
    %1200 = vmatpush1.bf16.msra.mxu0 %v1056
    %1201 = vmatprep.subr.bf16.mxu0 0
    %1202 = vmatpush1.bf16.msra.mxu0 %v1061
    %1203 = vmatprep.subr.bf16.mxu0 0
    %1204 = vmatpush1.bf16.msra.mxu0 %v1066
    %1205 = vmatprep.subr.bf16.mxu0 0
    %1206 = vmatpush1.bf16.msra.mxu0 %v1071
    %1207 = vmatprep.subr.bf16.mxu0 0
    %1208 = vmatpush1.bf16.msra.mxu0 %v1115
    %1209 = vmatprep.subr.bf16.mxu0 0
    %1210 = vmatpush1.bf16.msra.mxu0 0
    %1211 = vmatprep.subr.bf16.mxu0 0
    %1212 = vmatpush1.bf16.msra.mxu0 0
    %1213 = vmatprep.subr.bf16.mxu0 0
    %1214 = vmatpush1.bf16.msra.mxu0 0
    %1215 = vmatprep.subr.bf16.mxu0 0
    %1216 = vmatpush1.bf16.msra.mxu0 0
    %1217 = vmatprep.subr.bf16.mxu0 0
    %1218 = vmatpush1.bf16.msra.mxu0 0
    %1219 = vmatprep.subr.bf16.mxu0 0
    %1220 = vmatpush1.bf16.msra.mxu0 0
    %1221 = vmatprep.subr.bf16.mxu0 0
    %1222 = vmatpush1.bf16.msra.mxu0 0
    %1223 = vmatprep.subr.bf16.mxu0 0
    %1224 = vmatpush1.bf16.msra.mxu0 0
    %1225 = vmatprep.subr.bf16.mxu0 0
    %1226 = vmatpush1.bf16.msra.mxu0 0
    %1227 = vmatprep.subr.bf16.mxu0 0
    %1228 = vmatpush1.bf16.msra.mxu0 0
    %1229 = vmatprep.subr.bf16.mxu0 0
    %1230 = vmatpush1.bf16.msra.mxu0 0
    %1231 = vmatprep.mubr.bf16.mxu0 0
    %1232 = vmatmul.mubr.bf16.gmra.mrb[0].mxu0 %v1099
    %v1233 = vpop.f32.mrb[0].mxu0
    %v1234 = vadd.f32 %v978, %v1233
    %v1235 = vpop.f32.mrb[0].mxu0
    %v1236 = vpop.f32.mrb[0].mxu0
    %v1237 = vpop.f32.mrb[0].mxu0
    %1238 = vdwg.mxu0
    %v1239 = vmax.f32 %v1152, 0.0
    %v1240 = vmax.f32 %v1154, 0.0
    %v1241 = vmax.f32 %v1193, 0.0
    %v1242 = vmax.f32 %v1195, 0.0
    %v1243 = vmax.f32 %v1234, 0.0
    %v1244 = vpack.c.bf16 %v1239, %v1239
    %v1245 = vpack.c.bf16 %v1240, %v1240
    %v1246 = vpack.c.bf16 %v1241, %v1241
    %v1247 = vpack.c.bf16 %v1242, %v1242
    %v1248 = vpack.c.bf16 %v1243, %v1243
    %v1249 = vld [vmem:[#allocation7] sm:$0xf]
    %v1250 = vld [vmem:[#allocation7 + $0x4] sm:$0xf]
    %v1251 = vld [vmem:[#allocation7 + $0x8] sm:$0xf]
    %v1252 = vld [vmem:[#allocation7 + $0xc] sm:$0xf]
    %v1253 = vld [vmem:[#allocation7 + $0x10] sm:$0xf]
    %v1254 = vld [vmem:[#allocation7 + $0x14] sm:$0xf]
    %v1255 = vld [vmem:[#allocation7 + $0x18] sm:$0xf]
    %v1256 = vld [vmem:[#allocation7 + $0x1c] sm:$0xf]
    %v1257 = vld [vmem:[#allocation7 + $0x20] sm:$0xf]
    %v1258 = vld [vmem:[#allocation7 + $0x24] sm:$0xf]
    %v1259 = vld [vmem:[#allocation7 + $0x28] sm:$0xf]
    %v1260 = vld [vmem:[#allocation7 + $0x2c] sm:$0xf]
    %v1261 = vld [vmem:[#allocation7 + $0x30] sm:$0xf]
    %v1262 = vld [vmem:[#allocation7 + $0x34] sm:$0xf]
    %v1263 = vld [vmem:[#allocation7 + $0x38] sm:$0xf]
    %v1264 = vld [vmem:[#allocation7 + $0x3c] sm:$0xf]
    %v1265 = vld [vmem:[#allocation7 + $0x40] sm:$0xf]
    %v1266 = vld [vmem:[#allocation7 + $0x44] sm:$0xf]
    %v1267 = vld [vmem:[#allocation7 + $0x48] sm:$0xf]
    %v1268 = vld [vmem:[#allocation7 + $0x4c] sm:$0xf]
    %v1269 = vld [vmem:[#allocation7 + $0x50] sm:$0xf]
    %v1270 = vld [vmem:[#allocation7 + $0x54] sm:$0xf]
    %v1271 = vld [vmem:[#allocation7 + $0x58] sm:$0xf]
    %v1272 = vld [vmem:[#allocation7 + $0x5c] sm:$0xf]
    %v1273 = vld [vmem:[#allocation7 + $0x60] sm:$0xf]
    %v1274 = vld [vmem:[#allocation7 + $0x64] sm:$0xf]
    %v1275 = vld [vmem:[#allocation7 + $0x68] sm:$0xf]
    %v1276 = vld [vmem:[#allocation7 + $0x6c] sm:$0xf]
    %v1277 = vld [vmem:[#allocation7 + $0x70] sm:$0xf]
    %v1278 = vld [vmem:[#allocation7 + $0x74] sm:$0xf]
    %v1279 = vld [vmem:[#allocation7 + $0x78] sm:$0xf]
    %v1280 = vld [vmem:[#allocation7 + $0x7c] sm:$0xf]
    %v1281 = vld [vmem:[#allocation7 + $0x80] sm:$0xf]
    %v1282 = vld [vmem:[#allocation7 + $0x84] sm:$0xf]
    %v1283 = vld [vmem:[#allocation7 + $0x88] sm:$0xf]
    %v1284 = vld [vmem:[#allocation7 + $0x8c] sm:$0xf]
    %v1285 = vld [vmem:[#allocation7 + $0x90] sm:$0xf]
    %v1286 = vld [vmem:[#allocation7 + $0x94] sm:$0xf]
    %v1287 = vld [vmem:[#allocation7 + $0x98] sm:$0xf]
    %v1288 = vld [vmem:[#allocation7 + $0x9c] sm:$0xf]
    %v1289 = vld [vmem:[#allocation7 + $0xa0] sm:$0xf]
    %v1290 = vld [vmem:[#allocation7 + $0xa4] sm:$0xf]
    %v1291 = vld [vmem:[#allocation7 + $0xa8] sm:$0xf]
    %v1292 = vld [vmem:[#allocation7 + $0xac] sm:$0xf]
    %v1293 = vld [vmem:[#allocation7 + $0xb0] sm:$0xf]
    %v1294 = vld [vmem:[#allocation7 + $0xb4] sm:$0xf]
    %v1295 = vld [vmem:[#allocation7 + $0xb8] sm:$0xf]
    %v1296 = vld [vmem:[#allocation7 + $0xbc] sm:$0xf]
    %v1297 = vld [vmem:[#allocation7 + $0xc0] sm:$0xf]
    %v1298 = vld [vmem:[#allocation7 + $0xc4] sm:$0xf]
    %v1299 = vld [vmem:[#allocation7 + $0xc8] sm:$0xf]
    %v1300 = vld [vmem:[#allocation7 + $0xcc] sm:$0xf]
    %v1301 = vld [vmem:[#allocation7 + $0xd0] sm:$0xf]
    %v1302 = vld [vmem:[#allocation7 + $0xd4] sm:$0xf]
    %v1303 = vld [vmem:[#allocation7 + $0xd8] sm:$0xf]
    %v1304 = vld [vmem:[#allocation7 + $0xdc] sm:$0xf]
    %v1305 = vld [vmem:[#allocation7 + $0xe0] sm:$0xf]
    %v1306 = vld [vmem:[#allocation7 + $0xe4] sm:$0xf]
    %v1307 = vld [vmem:[#allocation7 + $0xe8] sm:$0xf]
    %v1308 = vld [vmem:[#allocation7 + $0xec] sm:$0xf]
    %v1309 = vld [vmem:[#allocation7 + $0xf0] sm:$0xf]
    %v1310 = vld [vmem:[#allocation7 + $0xf4] sm:$0xf]
    %v1311 = vld [vmem:[#allocation7 + $0xf8] sm:$0xf]
    %v1312 = vld [vmem:[#allocation7 + $0xfc] sm:$0xf]
    %v1313 = vld [vmem:[#allocation7 + $0x100] sm:$0xf]
    %v1314 = vld [vmem:[#allocation7 + $0x104] sm:$0xf]
    %v1315 = vld [vmem:[#allocation7 + $0x108] sm:$0xf]
    %v1316 = vld [vmem:[#allocation7 + $0x10c] sm:$0xf]
    %v1317 = vld [vmem:[#allocation7 + $0x110] sm:$0xf]
    %v1318 = vld [vmem:[#allocation7 + $0x114] sm:$0xf]
    %v1319 = vld [vmem:[#allocation7 + $0x118] sm:$0xf]
    %v1320 = vld [vmem:[#allocation7 + $0x11c] sm:$0xf]
    %v1321 = vld [vmem:[#allocation7 + $0x120] sm:$0xf]
    %v1322 = vld [vmem:[#allocation7 + $0x124] sm:$0xf]
    %v1323 = vld [vmem:[#allocation7 + $0x128] sm:$0xf]
    %v1324 = vld [vmem:[#allocation7 + $0x12c] sm:$0xf]
    %v1325 = vld [vmem:[#allocation7 + $0x130] sm:$0xf]
    %v1326 = vld [vmem:[#allocation7 + $0x134] sm:$0xf]
    %v1327 = vld [vmem:[#allocation7 + $0x138] sm:$0xf]
    %v1407 = vunpack.c.l.b16 %v1249
    %v1408 = vunpack.c.l.b16 %v1250
    %v1409 = vunpack.c.l.b16 %v1251
    %v1410 = vunpack.c.l.b16 %v1252
    %v1411 = vunpack.c.l.b16 %v1253
    %v1412 = vunpack.c.l.b16 %v1254
    %v1413 = vunpack.c.l.b16 %v1255
    %v1414 = vunpack.c.l.b16 %v1256
    %v1415 = vunpack.c.l.b16 %v1257
    %v1416 = vunpack.c.l.b16 %v1258
    %v1417 = vunpack.c.l.b16 %v1259
    %v1418 = vunpack.c.l.b16 %v1260
    %v1419 = vunpack.c.l.b16 %v1261
    %v1420 = vunpack.c.l.b16 %v1262
    %v1421 = vunpack.c.l.b16 %v1263
    %v1422 = vunpack.c.l.b16 %v1264
    %v1423 = vunpack.c.l.b16 %v1265
    %v1424 = vunpack.c.l.b16 %v1266
    %v1425 = vunpack.c.l.b16 %v1267
    %v1426 = vunpack.c.l.b16 %v1268
    %v1427 = vunpack.c.l.b16 %v1269
    %v1428 = vunpack.c.l.b16 %v1270
    %v1429 = vunpack.c.l.b16 %v1271
    %v1430 = vunpack.c.l.b16 %v1272
    %v1431 = vunpack.c.l.b16 %v1273
    %v1432 = vunpack.c.l.b16 %v1274
    %v1433 = vunpack.c.l.b16 %v1275
    %v1434 = vunpack.c.l.b16 %v1276
    %v1435 = vunpack.c.l.b16 %v1277
    %v1436 = vunpack.c.l.b16 %v1278
    %v1437 = vunpack.c.l.b16 %v1279
    %v1438 = vunpack.c.l.b16 %v1280
    %v1439 = vunpack.c.l.b16 %v1281
    %v1440 = vunpack.c.l.b16 %v1282
    %v1441 = vunpack.c.l.b16 %v1283
    %v1442 = vunpack.c.l.b16 %v1284
    %v1443 = vunpack.c.l.b16 %v1285
    %v1444 = vunpack.c.l.b16 %v1286
    %v1445 = vunpack.c.l.b16 %v1287
    %v1446 = vunpack.c.l.b16 %v1288
    %v1447 = vunpack.c.l.b16 %v1289
    %v1448 = vunpack.c.l.b16 %v1290
    %v1449 = vunpack.c.l.b16 %v1291
    %v1450 = vunpack.c.l.b16 %v1292
    %v1451 = vunpack.c.l.b16 %v1293
    %v1452 = vunpack.c.l.b16 %v1294
    %v1453 = vunpack.c.l.b16 %v1295
    %v1454 = vunpack.c.l.b16 %v1296
    %v1455 = vunpack.c.l.b16 %v1297
    %v1456 = vunpack.c.l.b16 %v1298
    %v1457 = vunpack.c.l.b16 %v1299
    %v1458 = vunpack.c.l.b16 %v1300
    %v1459 = vunpack.c.l.b16 %v1301
    %v1460 = vunpack.c.l.b16 %v1302
    %v1461 = vunpack.c.l.b16 %v1303
    %v1462 = vunpack.c.l.b16 %v1304
    %v1463 = vunpack.c.l.b16 %v1305
    %v1464 = vunpack.c.l.b16 %v1306
    %v1465 = vunpack.c.l.b16 %v1307
    %v1466 = vunpack.c.l.b16 %v1308
    %v1467 = vunpack.c.l.b16 %v1309
    %v1468 = vunpack.c.l.b16 %v1310
    %v1469 = vunpack.c.l.b16 %v1311
    %v1470 = vunpack.c.l.b16 %v1312
    %v1471 = vunpack.c.l.b16 %v1313
    %v1472 = vunpack.c.l.b16 %v1314
    %v1473 = vunpack.c.l.b16 %v1315
    %v1474 = vunpack.c.l.b16 %v1316
    %v1475 = vunpack.c.l.b16 %v1317
    %v1476 = vunpack.c.l.b16 %v1318
    %v1477 = vunpack.c.l.b16 %v1319
    %v1478 = vunpack.c.l.b16 %v1320
    %v1479 = vunpack.c.l.b16 %v1321
    %v1480 = vunpack.c.l.b16 %v1322
    %v1481 = vunpack.c.l.b16 %v1323
    %v1482 = vunpack.c.l.b16 %v1324
    %v1483 = vunpack.c.l.b16 %v1325
    %v1484 = vunpack.c.l.b16 %v1326
    %v1485 = vunpack.c.l.b16 %v1327
    %v1486 = vpack.c.b16 %v1408, %v1407
    %v1487 = vpack.c.b16 %v1410, %v1409
    %v1488 = vpack.c.b16 %v1412, %v1411
    %v1489 = vpack.c.b16 %v1414, %v1413
    %v1490 = vpack.c.b16 %v1416, %v1415
    %v1491 = vpack.c.b16 %v1418, %v1417
    %v1492 = vpack.c.b16 %v1420, %v1419
    %v1493 = vpack.c.b16 %v1422, %v1421
    %v1494 = vpack.c.b16 %v1424, %v1423
    %v1495 = vpack.c.b16 %v1426, %v1425
    %v1496 = vpack.c.b16 %v1428, %v1427
    %v1497 = vpack.c.b16 %v1430, %v1429
    %v1498 = vpack.c.b16 %v1432, %v1431
    %v1499 = vpack.c.b16 %v1434, %v1433
    %v1500 = vpack.c.b16 %v1436, %v1435
    %v1501 = vpack.c.b16 %v1438, %v1437
    %v1502 = vpack.c.b16 %v1440, %v1439
    %v1503 = vpack.c.b16 %v1442, %v1441
    %v1504 = vpack.c.b16 %v1444, %v1443
    %v1505 = vpack.c.b16 %v1446, %v1445
    %v1506 = vpack.c.b16 %v1448, %v1447
    %v1507 = vpack.c.b16 %v1450, %v1449
    %v1508 = vpack.c.b16 %v1452, %v1451
    %v1509 = vpack.c.b16 %v1454, %v1453
    %v1510 = vpack.c.b16 %v1456, %v1455
    %v1511 = vpack.c.b16 %v1458, %v1457
    %v1512 = vpack.c.b16 %v1460, %v1459
    %v1513 = vpack.c.b16 %v1462, %v1461
    %v1514 = vpack.c.b16 %v1464, %v1463
    %v1515 = vpack.c.b16 %v1466, %v1465
    %v1516 = vpack.c.b16 %v1468, %v1467
    %v1517 = vpack.c.b16 %v1470, %v1469
    %v1518 = vpack.c.b16 %v1472, %v1471
    %v1519 = vpack.c.b16 %v1474, %v1473
    %v1520 = vpack.c.b16 %v1476, %v1475
    %v1521 = vpack.c.b16 %v1478, %v1477
    %v1522 = vpack.c.b16 %v1480, %v1479
    %v1523 = vpack.c.b16 %v1482, %v1481
    %v1524 = vpack.c.b16 %v1484, %v1483
    %v1525 = vpack.c.b16 %v1485, %v1485
    %vm1565 = vcmask 982016
    %v1567 = vsel %vm1565, %v1248, 0
    %v1570 = vsel %vm1101, %v1525, 0
    %1572 = vmatprep.subr.bf16.mxu0 0
    %1573 = vmatpush1.bf16.msra.mxu0 %v1486
    %1574 = vmatprep.subr.bf16.mxu0 0
    %1575 = vmatpush1.bf16.msra.mxu0 %v1487
    %1576 = vmatprep.subr.bf16.mxu0 0
    %1577 = vmatpush1.bf16.msra.mxu0 %v1488
    %1578 = vmatprep.subr.bf16.mxu0 0
    %1579 = vmatpush1.bf16.msra.mxu0 %v1489
    %1580 = vmatprep.subr.bf16.mxu0 0
    %1581 = vmatpush1.bf16.msra.mxu0 %v1490
    %1582 = vmatprep.subr.bf16.mxu0 0
    %1583 = vmatpush1.bf16.msra.mxu0 %v1491
    %1584 = vmatprep.subr.bf16.mxu0 0
    %1585 = vmatpush1.bf16.msra.mxu0 %v1492
    %1586 = vmatprep.subr.bf16.mxu0 0
    %1587 = vmatpush1.bf16.msra.mxu0 %v1493
    %1588 = vmatprep.subr.bf16.mxu0 0
    %1589 = vmatpush1.bf16.msra.mxu0 %v1494
    %1590 = vmatprep.subr.bf16.mxu0 0
    %1591 = vmatpush1.bf16.msra.mxu0 %v1495
    %1592 = vmatprep.subr.bf16.mxu0 0
    %1593 = vmatpush1.bf16.msra.mxu0 %v1496
    %1594 = vmatprep.subr.bf16.mxu0 0
    %1595 = vmatpush1.bf16.msra.mxu0 %v1497
    %1596 = vmatprep.subr.bf16.mxu0 0
    %1597 = vmatpush1.bf16.msra.mxu0 %v1498
    %1598 = vmatprep.subr.bf16.mxu0 0
    %1599 = vmatpush1.bf16.msra.mxu0 %v1499
    %1600 = vmatprep.subr.bf16.mxu0 0
    %1601 = vmatpush1.bf16.msra.mxu0 %v1500
    %1602 = vmatprep.subr.bf16.mxu0 0
    %1603 = vmatpush1.bf16.msra.mxu0 %v1501
    %1604 = vmatprep.mubr.bf16.mxu0 %v1245
    %1605 = vmatmul.mubr.bf16.gmra.mrb[0].mxu0 %v1244
    %v1606 = vpop.f32.mrb[0].mxu0
    %v1607 = vadd.f32 0.0, %v1606
    %v1608 = vpop.f32.mrb[0].mxu0
    %v1609 = vpop.f32.mrb[0].mxu0
    %v1610 = vpop.f32.mrb[0].mxu0
    %1611 = vdwg.mxu0
    %1612 = vmatprep.subr.bf16.mxu0 0
    %1613 = vmatpush1.bf16.msra.mxu0 %v1502
    %1614 = vmatprep.subr.bf16.mxu0 0
    %1615 = vmatpush1.bf16.msra.mxu0 %v1503
    %1616 = vmatprep.subr.bf16.mxu0 0
    %1617 = vmatpush1.bf16.msra.mxu0 %v1504
    %1618 = vmatprep.subr.bf16.mxu0 0
    %1619 = vmatpush1.bf16.msra.mxu0 %v1505
    %1620 = vmatprep.subr.bf16.mxu0 0
    %1621 = vmatpush1.bf16.msra.mxu0 %v1506
    %1622 = vmatprep.subr.bf16.mxu0 0
    %1623 = vmatpush1.bf16.msra.mxu0 %v1507
    %1624 = vmatprep.subr.bf16.mxu0 0
    %1625 = vmatpush1.bf16.msra.mxu0 %v1508
    %1626 = vmatprep.subr.bf16.mxu0 0
    %1627 = vmatpush1.bf16.msra.mxu0 %v1509
    %1628 = vmatprep.subr.bf16.mxu0 0
    %1629 = vmatpush1.bf16.msra.mxu0 %v1510
    %1630 = vmatprep.subr.bf16.mxu0 0
    %1631 = vmatpush1.bf16.msra.mxu0 %v1511
    %1632 = vmatprep.subr.bf16.mxu0 0
    %1633 = vmatpush1.bf16.msra.mxu0 %v1512
    %1634 = vmatprep.subr.bf16.mxu0 0
    %1635 = vmatpush1.bf16.msra.mxu0 %v1513
    %1636 = vmatprep.subr.bf16.mxu0 0
    %1637 = vmatpush1.bf16.msra.mxu0 %v1514
    %1638 = vmatprep.subr.bf16.mxu0 0
    %1639 = vmatpush1.bf16.msra.mxu0 %v1515
    %1640 = vmatprep.subr.bf16.mxu0 0
    %1641 = vmatpush1.bf16.msra.mxu0 %v1516
    %1642 = vmatprep.subr.bf16.mxu0 0
    %1643 = vmatpush1.bf16.msra.mxu0 %v1517
    %1644 = vmatprep.mubr.bf16.mxu0 %v1247
    %1645 = vmatmul.mubr.bf16.gmra.mrb[0].mxu0 %v1246
    %v1646 = vpop.f32.mrb[0].mxu0
    %v1647 = vadd.f32 %v1607, %v1646
    %v1648 = vpop.f32.mrb[0].mxu0
    %v1649 = vpop.f32.mrb[0].mxu0
    %v1650 = vpop.f32.mrb[0].mxu0
    %1651 = vdwg.mxu0
    %1652 = vmatprep.subr.bf16.mxu0 0
    %1653 = vmatpush1.bf16.msra.mxu0 %v1518
    %1654 = vmatprep.subr.bf16.mxu0 0
    %1655 = vmatpush1.bf16.msra.mxu0 %v1519
    %1656 = vmatprep.subr.bf16.mxu0 0
    %1657 = vmatpush1.bf16.msra.mxu0 %v1520
    %1658 = vmatprep.subr.bf16.mxu0 0
    %1659 = vmatpush1.bf16.msra.mxu0 %v1521
    %1660 = vmatprep.subr.bf16.mxu0 0
    %1661 = vmatpush1.bf16.msra.mxu0 %v1522
    %1662 = vmatprep.subr.bf16.mxu0 0
    %1663 = vmatpush1.bf16.msra.mxu0 %v1523
    %1664 = vmatprep.subr.bf16.mxu0 0
    %1665 = vmatpush1.bf16.msra.mxu0 %v1524
    %1666 = vmatprep.subr.bf16.mxu0 0
    %1667 = vmatpush1.bf16.msra.mxu0 %v1570
    %1668 = vmatprep.subr.bf16.mxu0 0
    %1669 = vmatpush1.bf16.msra.mxu0 0
    %1670 = vmatprep.subr.bf16.mxu0 0
    %1671 = vmatpush1.bf16.msra.mxu0 0
    %1672 = vmatprep.subr.bf16.mxu0 0
    %1673 = vmatpush1.bf16.msra.mxu0 0
    %1674 = vmatprep.subr.bf16.mxu0 0
    %1675 = vmatpush1.bf16.msra.mxu0 0
    %1676 = vmatprep.subr.bf16.mxu0 0
    %1677 = vmatpush1.bf16.msra.mxu0 0
    %1678 = vmatprep.subr.bf16.mxu0 0
    %1679 = vmatpush1.bf16.msra.mxu0 0
    %1680 = vmatprep.subr.bf16.mxu0 0
    %1681 = vmatpush1.bf16.msra.mxu0 0
    %1682 = vmatprep.subr.bf16.mxu0 0
    %1683 = vmatpush1.bf16.msra.mxu0 0
    %1684 = vmatprep.mubr.bf16.mxu0 0
    %1685 = vmatmul.mubr.bf16.gmra.mrb[0].mxu0 %v1567
    %v1686 = vpop.f32.mrb[0].mxu0
    %v1687 = vadd.f32 %v1647, %v1686
    %v1688 = vpop.f32.mrb[0].mxu0
    %v1689 = vpop.f32.mrb[0].mxu0
    %v1690 = vpop.f32.mrb[0].mxu0
    %1691 = vdwg.mxu0
    %1692 = vst [vmem:[#allocation9] sm:$0xff] %v1687
    // Predicated region
    $region38: #{tpu_custom_call.1} parent=1 // pred_check
      _
    $region39: #{tpu_custom_call.1} parent=1 // pred_check_branch
      %1694 = sbr.rel (0) target = $region41
    $region40: #{tpu_custom_call.1} parent=1 // pred_region
      %s1696 = ssub.s32 128, 128
      %1697 = vsyncadd [#allocation6], %s1696
      %s1699 = sshll.u32 [#allocation9], 4
      %s1700 = int_to_ptr.vmem [resolvable:$true] %s1699
      %1702 = dma.vmem_to_hbm [thread:$0]  %s1700, 128, %s7, [#allocation6]
    $region41: #{tpu_custom_call.1} parent=1 // pred_fallthru
      _
    // Predicated region
    $region42: #{tpu_custom_call.1} parent=1 // pred_check
      _
    $region43: #{tpu_custom_call.1} parent=1 // pred_check_branch
      %1704 = sbr.rel (0) target = $region45
    $region44: #{tpu_custom_call.1} parent=1 // pred_region
      %1705 = dma.done [#allocation6], 128
    $region45: #{tpu_custom_call.1} parent=1 // pred_fallthru
      _
    %1706 = vsyncpa [#allocation5], 1
    %1707 = vsyncpa [#allocation8], 1
    %1708 = vsyncpa [#allocation6], 1

</llo_original>
